<compile_context>
chip_gen: v7x
topology: tpu7x:2x2x1
jax: 0.10.0
libtpu: 0.0.40
codegen_flags: <defaults>
</compile_context>

<pallas_src>
import math

import jax
import jax.numpy as jnp
from jax.experimental import pallas as pl
from jax.experimental.pallas import tpu as pltpu


def _round_up(x, m):
    return ((x + m - 1) // m) * m


# --------------------------------------------------------------------------
# Pallas kernel
# --------------------------------------------------------------------------
def _local_conv_kernel(cols_ref, w_ref, bias_ref, o_ref):
    # cols_ref: (K*B, TL), w_ref: (K*C, TL), bias_ref: (C, TL), o_ref: (B, C, TL)
    B, C, TL = o_ref.shape
    K = cols_ref.shape[0] // B

    acc = jnp.zeros((B, C, TL), jnp.float32)
    # Unrolled reduction over K: each step is a tiny (B, C) outer product,
    # elementwise over the lane-dense L tile -> pure VPU work, no MXU overhead.
    for k in range(K):
        ck = cols_ref[pl.ds(k * B, B), :].astype(jnp.float32)   # (B, TL)
        wk = w_ref[pl.ds(k * C, C), :].astype(jnp.float32)      # (C, TL)
        acc = acc + ck[:, None, :] * wk[None, :, :]

    out = acc + bias_ref[...].astype(jnp.float32)[None, :, :]
    o_ref[...] = out.astype(o_ref.dtype)


# --------------------------------------------------------------------------
# Wrapper-side layout glue (plain JAX, no pass over the 9x-inflated cols)
# --------------------------------------------------------------------------
def _unfold_to_kb_l(x, kernel_size, padding, stride, dilation, out_hw):
    """x: (B, C, H, W) -> cols (K*B, L), rows k-major with torch.unfold ordering
    k = (c, kh, kw); L = outH*outW (row-major). Only x itself is transposed."""
    kH, kW = kernel_size
    pH, pW = padding
    sH, sW = stride
    dH, dW = dilation
    outH, outW = out_hw
    B, C, _, _ = x.shape

    xt = jnp.transpose(x, (1, 0, 2, 3))                       # (C, B, H, W)
    xp = jnp.pad(xt, ((0, 0), (0, 0), (pH, pH), (pW, pW)))
    patches = []
    for i in range(kH):
        for j in range(kW):
            h0, w0 = i * dH, j * dW
            patches.append(
                xp[:, :,
                   h0: h0 + sH * (outH - 1) + 1: sH,
                   w0: w0 + sW * (outW - 1) + 1: sW])          # (C, B, outH, outW)
    cols = jnp.stack(patches, axis=1)                          # (C, kH*kW, B, oH, oW)
    K = C * kH * kW
    return cols.reshape(K * B, outH * outW)                    # free reshape


def _choose_lane_tile(L, per_loc_bytes, vmem_budget_bytes):
    """Largest multiple-of-128 lane tile fitting the (double-buffered) budget."""
    tl = vmem_budget_bytes // (2 * per_loc_bytes)
    tl = max(128, (tl // 128) * 128)
    tl = min(tl, 8192)
    l128 = _round_up(L, 128)
    tl = min(tl, l128)
    # Prefer >= 2 grid steps (megacore sharding) when it costs no extra padding.
    if tl == l128 and l128 >= 256 and (l128 // 2) % 128 == 0:
        tl = l128 // 2
    return tl


def conv2d_local_pallas(x, weight, bias, *, stride=(1, 1), padding=(0, 0),
                        dilation=(1, 1), vmem_budget_bytes=32 * 1024 * 1024):
    """x: (B, inC, H, W); weight: (outH, outW, outC, inC, kH, kW);
    bias: (outC, outH, outW) or None.  Returns (B, outC, outH, outW)."""
    B, inC, H, W = x.shape
    outH, outW, outC, _, kH, kW = weight.shape
    L = outH * outW
    K = inC * kH * kW

    # ---- layouts consumed by the kernel ----
    cols = _unfold_to_kb_l(x, (kH, kW), padding, stride, dilation, (outH, outW))
    # Weight is a static parameter in the original module; this one-time
    # transform would be constant-folded in real use.
    w2d = weight.reshape(L, outC, K).transpose(2, 1, 0).reshape(K * outC, L)
    if bias is not None:
        b2d = bias.reshape(outC, L).astype(x.dtype)
    else:
        b2d = jnp.zeros((outC, L), x.dtype)
    # TODO(synk): cast cols/w2d to bf16 on v6e/v7x (f32 accumulate) to halve the
    # dominant, zero-reuse weight HBM traffic; kept f32 here for v5e-VPU safety.

    # ---- VMEM-budget-derived lane tile over L ----
    itemsize = jnp.dtype(x.dtype).itemsize
    per_loc_bytes = itemsize * (K * B + K * outC + outC) \
        + itemsize * B * _round_up(outC, 8)        # output block (sublane padded)
    TL = _choose_lane_tile(L, per_loc_bytes, vmem_budget_bytes)
    L_pad = _round_up(L, TL)
    if L_pad != L:
        pad = L_pad - L
        cols = jnp.pad(cols, ((0, 0), (0, pad)))
        w2d = jnp.pad(w2d, ((0, 0), (0, pad)))
        b2d = jnp.pad(b2d, ((0, 0), (0, pad)))

    grid = (L_pad // TL,)

    out_bcl = pl.pallas_call(
        _local_conv_kernel,
        out_shape=jax.ShapeDtypeStruct((B, outC, L_pad), x.dtype),
        grid_spec=pltpu.PrefetchScalarGridSpec(
            num_scalar_prefetch=0,
            grid=grid,
            in_specs=[
                pl.BlockSpec((K * B, TL), lambda l: (0, l)),
                pl.BlockSpec((K * outC, TL), lambda l: (0, l)),
                pl.BlockSpec((outC, TL), lambda l: (0, l)),
            ],
            out_specs=pl.BlockSpec((B, outC, TL), lambda l: (0, 0, l)),
        ),
        compiler_params=pltpu.CompilerParams(
            dimension_semantics=("parallel",),
            vmem_limit_bytes=48 * 1024 * 1024,
        ),
    )(cols, w2d, b2d)

    # (B, outC, L_pad) -> NCHW, free except the trailing-pad slice.
    return out_bcl[:, :, :L].reshape(B, outC, outH, outW)


# --------------------------------------------------------------------------
# Pure-JAX reference mirroring PyTorch conv2d_local semantics
# --------------------------------------------------------------------------
def conv2d_local_ref(x, weight, bias, *, stride, padding, dilation):
    B = x.shape[0]
    outH, outW, outC, inC, kH, kW = weight.shape
    L, K = outH * outW, inC * kH * kW
    pH, pW = padding
    sH, sW = stride
    dH, dW = dilation
    xp = jnp.pad(x, ((0, 0), (0, 0), (pH, pH), (pW, pW)))
    patches = []
    for i in range(kH):
        for j in range(kW):
            h0, w0 = i * dH, j * dW
            patches.append(
                xp[:, :,
                   h0: h0 + sH * (outH - 1) + 1: sH,
                   w0: w0 + sW * (outW - 1) + 1: sW])
    cols = jnp.stack(patches, axis=2).reshape(B, K, L)       # (B, K, L), k=(c,kh,kw)
    cols = cols.transpose(0, 2, 1)                           # (B, L, K)
    w = weight.reshape(L, outC, K).transpose(0, 2, 1)        # (L, K, outC)
    out = jnp.einsum("blk,lkc->blc", cols, w)                # (B, L, outC)
    out = out.reshape(B, outH, outW, outC).transpose(0, 3, 1, 2)
    if bias is not None:
        out = out + bias[None]
    return out


if __name__ == "__main__":
    # Small shapes consistent with Conv2dLocal
    B, inC, H, W = 2, 4, 16, 16
    outC = 8
    kernel_size = (3, 3)
    stride = (1, 1)
    padding = (1, 1)
    dilation = (1, 1)
    kH, kW = kernel_size

    outH = int(math.floor((H + 2 * padding[0] - dilation[0] * (kH - 1) - 1) / stride[0] + 1))
    outW = int(math.floor((W + 2 * padding[1] - dilation[1] * (kW - 1) - 1) / stride[1] + 1))

    key = jax.random.PRNGKey(0)
    kx, kw_, kb = jax.random.split(key, 3)

    # reset_parameters(): U(-stdv, stdv), stdv = 1/sqrt(inC*kH*kW)
    n = inC * kH * kW
    stdv = 1.0 / math.sqrt(n)
    weight = jax.random.uniform(
        kw_, (outH, outW, outC, inC, kH, kW), jnp.float32, minval=-stdv, maxval=stdv)
    bias = jax.random.uniform(
        kb, (outC, outH, outW), jnp.float32, minval=-stdv, maxval=stdv)
    x = jax.random.normal(kx, (B, inC, H, W), jnp.float32)

    out = conv2d_local_pallas(
        x, weight, bias, stride=stride, padding=padding, dilation=dilation)
    out = jax.block_until_ready(out)

    ref = conv2d_local_ref(
        x, weight, bias, stride=stride, padding=padding, dilation=dilation)

    assert out.shape == (B, outC, outH, outW)
    assert jnp.allclose(out, ref, atol=1e-4, rtol=1e-4)

    print("KERNEL_OK")
</pallas_src>

<mosaic_0001>
module attributes {stable_mosaic.version = 11 : i64} {
  func.func @_local_conv_kernel(%arg0: i32, %arg1: memref<72x128xf32, #tpu.memory_space<vmem>>, %arg2: memref<288x128xf32, #tpu.memory_space<vmem>>, %arg3: memref<8x128xf32, #tpu.memory_space<vmem>>, %arg4: memref<2x8x128xf32, #tpu.memory_space<vmem>>) attributes {dimension_semantics = [#tpu.dimension_semantics<parallel>], iteration_bounds = array<i64: 2>, scalar_prefetch = 0 : i64, scratch_operands = 0 : i64, tpu.core_type = #tpu.core_type<tc>, window_params = [{transform_indices = @transform_0, window_bounds = array<i64: 72, 128>}, {transform_indices = @transform_1, window_bounds = array<i64: 288, 128>}, {transform_indices = @transform_2, window_bounds = array<i64: 8, 128>}, {transform_indices = @transform_3, window_bounds = array<i64: 2, 8, 128>}]} {
    %cst = arith.constant 0.000000e+00 : f32
    %0 = vector.broadcast %cst : f32 to vector<2x8x128xf32>
    %c0 = arith.constant 0 : index
    %c0_0 = arith.constant 0 : index
    %1 = vector.load %arg1[%c0, %c0_0] : memref<72x128xf32, #tpu.memory_space<vmem>>, vector<2x128xf32>
    %c0_1 = arith.constant 0 : index
    %c0_2 = arith.constant 0 : index
    %2 = vector.load %arg2[%c0_1, %c0_2] : memref<288x128xf32, #tpu.memory_space<vmem>>, vector<8x128xf32>
    %3 = vector.shape_cast %1 : vector<2x128xf32> to vector<2x1x128xf32>
    %4 = vector.shape_cast %2 : vector<8x128xf32> to vector<1x8x128xf32>
    %5 = vector.broadcast %3 : vector<2x1x128xf32> to vector<2x8x128xf32>
    %6 = vector.broadcast %4 : vector<1x8x128xf32> to vector<2x8x128xf32>
    %7 = arith.mulf %5, %6 : vector<2x8x128xf32>
    %8 = arith.addf %0, %7 : vector<2x8x128xf32>
    %c2 = arith.constant 2 : index
    %c0_3 = arith.constant 0 : index
    %9 = vector.load %arg1[%c2, %c0_3] : memref<72x128xf32, #tpu.memory_space<vmem>>, vector<2x128xf32>
    %c8 = arith.constant 8 : index
    %c0_4 = arith.constant 0 : index
    %10 = vector.load %arg2[%c8, %c0_4] : memref<288x128xf32, #tpu.memory_space<vmem>>, vector<8x128xf32>
    %11 = vector.shape_cast %9 : vector<2x128xf32> to vector<2x1x128xf32>
    %12 = vector.shape_cast %10 : vector<8x128xf32> to vector<1x8x128xf32>
    %13 = vector.broadcast %11 : vector<2x1x128xf32> to vector<2x8x128xf32>
    %14 = vector.broadcast %12 : vector<1x8x128xf32> to vector<2x8x128xf32>
    %15 = arith.mulf %13, %14 : vector<2x8x128xf32>
    %16 = arith.addf %8, %15 : vector<2x8x128xf32>
    %c4 = arith.constant 4 : index
    %c0_5 = arith.constant 0 : index
    %17 = vector.load %arg1[%c4, %c0_5] : memref<72x128xf32, #tpu.memory_space<vmem>>, vector<2x128xf32>
    %c16 = arith.constant 16 : index
    %c0_6 = arith.constant 0 : index
    %18 = vector.load %arg2[%c16, %c0_6] : memref<288x128xf32, #tpu.memory_space<vmem>>, vector<8x128xf32>
    %19 = vector.shape_cast %17 : vector<2x128xf32> to vector<2x1x128xf32>
    %20 = vector.shape_cast %18 : vector<8x128xf32> to vector<1x8x128xf32>
    %21 = vector.broadcast %19 : vector<2x1x128xf32> to vector<2x8x128xf32>
    %22 = vector.broadcast %20 : vector<1x8x128xf32> to vector<2x8x128xf32>
    %23 = arith.mulf %21, %22 : vector<2x8x128xf32>
    %24 = arith.addf %16, %23 : vector<2x8x128xf32>
    %c6 = arith.constant 6 : index
    %c0_7 = arith.constant 0 : index
    %25 = vector.load %arg1[%c6, %c0_7] : memref<72x128xf32, #tpu.memory_space<vmem>>, vector<2x128xf32>
    %c24 = arith.constant 24 : index
    %c0_8 = arith.constant 0 : index
    %26 = vector.load %arg2[%c24, %c0_8] : memref<288x128xf32, #tpu.memory_space<vmem>>, vector<8x128xf32>
    %27 = vector.shape_cast %25 : vector<2x128xf32> to vector<2x1x128xf32>
    %28 = vector.shape_cast %26 : vector<8x128xf32> to vector<1x8x128xf32>
    %29 = vector.broadcast %27 : vector<2x1x128xf32> to vector<2x8x128xf32>
    %30 = vector.broadcast %28 : vector<1x8x128xf32> to vector<2x8x128xf32>
    %31 = arith.mulf %29, %30 : vector<2x8x128xf32>
    %32 = arith.addf %24, %31 : vector<2x8x128xf32>
    %c8_9 = arith.constant 8 : index
    %c0_10 = arith.constant 0 : index
    %33 = vector.load %arg1[%c8_9, %c0_10] : memref<72x128xf32, #tpu.memory_space<vmem>>, vector<2x128xf32>
    %c32 = arith.constant 32 : index
    %c0_11 = arith.constant 0 : index
    %34 = vector.load %arg2[%c32, %c0_11] : memref<288x128xf32, #tpu.memory_space<vmem>>, vector<8x128xf32>
    %35 = vector.shape_cast %33 : vector<2x128xf32> to vector<2x1x128xf32>
    %36 = vector.shape_cast %34 : vector<8x128xf32> to vector<1x8x128xf32>
    %37 = vector.broadcast %35 : vector<2x1x128xf32> to vector<2x8x128xf32>
    %38 = vector.broadcast %36 : vector<1x8x128xf32> to vector<2x8x128xf32>
    %39 = arith.mulf %37, %38 : vector<2x8x128xf32>
    %40 = arith.addf %32, %39 : vector<2x8x128xf32>
    %c10 = arith.constant 10 : index
    %c0_12 = arith.constant 0 : index
    %41 = vector.load %arg1[%c10, %c0_12] : memref<72x128xf32, #tpu.memory_space<vmem>>, vector<2x128xf32>
    %c40 = arith.constant 40 : index
    %c0_13 = arith.constant 0 : index
    %42 = vector.load %arg2[%c40, %c0_13] : memref<288x128xf32, #tpu.memory_space<vmem>>, vector<8x128xf32>
    %43 = vector.shape_cast %41 : vector<2x128xf32> to vector<2x1x128xf32>
    %44 = vector.shape_cast %42 : vector<8x128xf32> to vector<1x8x128xf32>
    %45 = vector.broadcast %43 : vector<2x1x128xf32> to vector<2x8x128xf32>
    %46 = vector.broadcast %44 : vector<1x8x128xf32> to vector<2x8x128xf32>
    %47 = arith.mulf %45, %46 : vector<2x8x128xf32>
    %48 = arith.addf %40, %47 : vector<2x8x128xf32>
    %c12 = arith.constant 12 : index
    %c0_14 = arith.constant 0 : index
    %49 = vector.load %arg1[%c12, %c0_14] : memref<72x128xf32, #tpu.memory_space<vmem>>, vector<2x128xf32>
    %c48 = arith.constant 48 : index
    %c0_15 = arith.constant 0 : index
    %50 = vector.load %arg2[%c48, %c0_15] : memref<288x128xf32, #tpu.memory_space<vmem>>, vector<8x128xf32>
    %51 = vector.shape_cast %49 : vector<2x128xf32> to vector<2x1x128xf32>
    %52 = vector.shape_cast %50 : vector<8x128xf32> to vector<1x8x128xf32>
    %53 = vector.broadcast %51 : vector<2x1x128xf32> to vector<2x8x128xf32>
    %54 = vector.broadcast %52 : vector<1x8x128xf32> to vector<2x8x128xf32>
    %55 = arith.mulf %53, %54 : vector<2x8x128xf32>
    %56 = arith.addf %48, %55 : vector<2x8x128xf32>
    %c14 = arith.constant 14 : index
    %c0_16 = arith.constant 0 : index
    %57 = vector.load %arg1[%c14, %c0_16] : memref<72x128xf32, #tpu.memory_space<vmem>>, vector<2x128xf32>
    %c56 = arith.constant 56 : index
    %c0_17 = arith.constant 0 : index
    %58 = vector.load %arg2[%c56, %c0_17] : memref<288x128xf32, #tpu.memory_space<vmem>>, vector<8x128xf32>
    %59 = vector.shape_cast %57 : vector<2x128xf32> to vector<2x1x128xf32>
    %60 = vector.shape_cast %58 : vector<8x128xf32> to vector<1x8x128xf32>
    %61 = vector.broadcast %59 : vector<2x1x128xf32> to vector<2x8x128xf32>
    %62 = vector.broadcast %60 : vector<1x8x128xf32> to vector<2x8x128xf32>
    %63 = arith.mulf %61, %62 : vector<2x8x128xf32>
    %64 = arith.addf %56, %63 : vector<2x8x128xf32>
    %c16_18 = arith.constant 16 : index
    %c0_19 = arith.constant 0 : index
    %65 = vector.load %arg1[%c16_18, %c0_19] : memref<72x128xf32, #tpu.memory_space<vmem>>, vector<2x128xf32>
    %c64 = arith.constant 64 : index
    %c0_20 = arith.constant 0 : index
    %66 = vector.load %arg2[%c64, %c0_20] : memref<288x128xf32, #tpu.memory_space<vmem>>, vector<8x128xf32>
    %67 = vector.shape_cast %65 : vector<2x128xf32> to vector<2x1x128xf32>
    %68 = vector.shape_cast %66 : vector<8x128xf32> to vector<1x8x128xf32>
    %69 = vector.broadcast %67 : vector<2x1x128xf32> to vector<2x8x128xf32>
    %70 = vector.broadcast %68 : vector<1x8x128xf32> to vector<2x8x128xf32>
    %71 = arith.mulf %69, %70 : vector<2x8x128xf32>
    %72 = arith.addf %64, %71 : vector<2x8x128xf32>
    %c18 = arith.constant 18 : index
    %c0_21 = arith.constant 0 : index
    %73 = vector.load %arg1[%c18, %c0_21] : memref<72x128xf32, #tpu.memory_space<vmem>>, vector<2x128xf32>
    %c72 = arith.constant 72 : index
    %c0_22 = arith.constant 0 : index
    %74 = vector.load %arg2[%c72, %c0_22] : memref<288x128xf32, #tpu.memory_space<vmem>>, vector<8x128xf32>
    %75 = vector.shape_cast %73 : vector<2x128xf32> to vector<2x1x128xf32>
    %76 = vector.shape_cast %74 : vector<8x128xf32> to vector<1x8x128xf32>
    %77 = vector.broadcast %75 : vector<2x1x128xf32> to vector<2x8x128xf32>
    %78 = vector.broadcast %76 : vector<1x8x128xf32> to vector<2x8x128xf32>
    %79 = arith.mulf %77, %78 : vector<2x8x128xf32>
    %80 = arith.addf %72, %79 : vector<2x8x128xf32>
    %c20 = arith.constant 20 : index
    %c0_23 = arith.constant 0 : index
    %81 = vector.load %arg1[%c20, %c0_23] : memref<72x128xf32, #tpu.memory_space<vmem>>, vector<2x128xf32>
    %c80 = arith.constant 80 : index
    %c0_24 = arith.constant 0 : index
    %82 = vector.load %arg2[%c80, %c0_24] : memref<288x128xf32, #tpu.memory_space<vmem>>, vector<8x128xf32>
    %83 = vector.shape_cast %81 : vector<2x128xf32> to vector<2x1x128xf32>
    %84 = vector.shape_cast %82 : vector<8x128xf32> to vector<1x8x128xf32>
    %85 = vector.broadcast %83 : vector<2x1x128xf32> to vector<2x8x128xf32>
    %86 = vector.broadcast %84 : vector<1x8x128xf32> to vector<2x8x128xf32>
    %87 = arith.mulf %85, %86 : vector<2x8x128xf32>
    %88 = arith.addf %80, %87 : vector<2x8x128xf32>
    %c22 = arith.constant 22 : index
    %c0_25 = arith.constant 0 : index
    %89 = vector.load %arg1[%c22, %c0_25] : memref<72x128xf32, #tpu.memory_space<vmem>>, vector<2x128xf32>
    %c88 = arith.constant 88 : index
    %c0_26 = arith.constant 0 : index
    %90 = vector.load %arg2[%c88, %c0_26] : memref<288x128xf32, #tpu.memory_space<vmem>>, vector<8x128xf32>
    %91 = vector.shape_cast %89 : vector<2x128xf32> to vector<2x1x128xf32>
    %92 = vector.shape_cast %90 : vector<8x128xf32> to vector<1x8x128xf32>
    %93 = vector.broadcast %91 : vector<2x1x128xf32> to vector<2x8x128xf32>
    %94 = vector.broadcast %92 : vector<1x8x128xf32> to vector<2x8x128xf32>
    %95 = arith.mulf %93, %94 : vector<2x8x128xf32>
    %96 = arith.addf %88, %95 : vector<2x8x128xf32>
    %c24_27 = arith.constant 24 : index
    %c0_28 = arith.constant 0 : index
    %97 = vector.load %arg1[%c24_27, %c0_28] : memref<72x128xf32, #tpu.memory_space<vmem>>, vector<2x128xf32>
    %c96 = arith.constant 96 : index
    %c0_29 = arith.constant 0 : index
    %98 = vector.load %arg2[%c96, %c0_29] : memref<288x128xf32, #tpu.memory_space<vmem>>, vector<8x128xf32>
    %99 = vector.shape_cast %97 : vector<2x128xf32> to vector<2x1x128xf32>
    %100 = vector.shape_cast %98 : vector<8x128xf32> to vector<1x8x128xf32>
    %101 = vector.broadcast %99 : vector<2x1x128xf32> to vector<2x8x128xf32>
    %102 = vector.broadcast %100 : vector<1x8x128xf32> to vector<2x8x128xf32>
    %103 = arith.mulf %101, %102 : vector<2x8x128xf32>
    %104 = arith.addf %96, %103 : vector<2x8x128xf32>
    %c26 = arith.constant 26 : index
    %c0_30 = arith.constant 0 : index
    %105 = vector.load %arg1[%c26, %c0_30] : memref<72x128xf32, #tpu.memory_space<vmem>>, vector<2x128xf32>
    %c104 = arith.constant 104 : index
    %c0_31 = arith.constant 0 : index
    %106 = vector.load %arg2[%c104, %c0_31] : memref<288x128xf32, #tpu.memory_space<vmem>>, vector<8x128xf32>
    %107 = vector.shape_cast %105 : vector<2x128xf32> to vector<2x1x128xf32>
    %108 = vector.shape_cast %106 : vector<8x128xf32> to vector<1x8x128xf32>
    %109 = vector.broadcast %107 : vector<2x1x128xf32> to vector<2x8x128xf32>
    %110 = vector.broadcast %108 : vector<1x8x128xf32> to vector<2x8x128xf32>
    %111 = arith.mulf %109, %110 : vector<2x8x128xf32>
    %112 = arith.addf %104, %111 : vector<2x8x128xf32>
    %c28 = arith.constant 28 : index
    %c0_32 = arith.constant 0 : index
    %113 = vector.load %arg1[%c28, %c0_32] : memref<72x128xf32, #tpu.memory_space<vmem>>, vector<2x128xf32>
    %c112 = arith.constant 112 : index
    %c0_33 = arith.constant 0 : index
    %114 = vector.load %arg2[%c112, %c0_33] : memref<288x128xf32, #tpu.memory_space<vmem>>, vector<8x128xf32>
    %115 = vector.shape_cast %113 : vector<2x128xf32> to vector<2x1x128xf32>
    %116 = vector.shape_cast %114 : vector<8x128xf32> to vector<1x8x128xf32>
    %117 = vector.broadcast %115 : vector<2x1x128xf32> to vector<2x8x128xf32>
    %118 = vector.broadcast %116 : vector<1x8x128xf32> to vector<2x8x128xf32>
    %119 = arith.mulf %117, %118 : vector<2x8x128xf32>
    %120 = arith.addf %112, %119 : vector<2x8x128xf32>
    %c30 = arith.constant 30 : index
    %c0_34 = arith.constant 0 : index
    %121 = vector.load %arg1[%c30, %c0_34] : memref<72x128xf32, #tpu.memory_space<vmem>>, vector<2x128xf32>
    %c120 = arith.constant 120 : index
    %c0_35 = arith.constant 0 : index
    %122 = vector.load %arg2[%c120, %c0_35] : memref<288x128xf32, #tpu.memory_space<vmem>>, vector<8x128xf32>
    %123 = vector.shape_cast %121 : vector<2x128xf32> to vector<2x1x128xf32>
    %124 = vector.shape_cast %122 : vector<8x128xf32> to vector<1x8x128xf32>
    %125 = vector.broadcast %123 : vector<2x1x128xf32> to vector<2x8x128xf32>
    %126 = vector.broadcast %124 : vector<1x8x128xf32> to vector<2x8x128xf32>
    %127 = arith.mulf %125, %126 : vector<2x8x128xf32>
    %128 = arith.addf %120, %127 : vector<2x8x128xf32>
    %c32_36 = arith.constant 32 : index
    %c0_37 = arith.constant 0 : index
    %129 = vector.load %arg1[%c32_36, %c0_37] : memref<72x128xf32, #tpu.memory_space<vmem>>, vector<2x128xf32>
    %c128 = arith.constant 128 : index
    %c0_38 = arith.constant 0 : index
    %130 = vector.load %arg2[%c128, %c0_38] : memref<288x128xf32, #tpu.memory_space<vmem>>, vector<8x128xf32>
    %131 = vector.shape_cast %129 : vector<2x128xf32> to vector<2x1x128xf32>
    %132 = vector.shape_cast %130 : vector<8x128xf32> to vector<1x8x128xf32>
    %133 = vector.broadcast %131 : vector<2x1x128xf32> to vector<2x8x128xf32>
    %134 = vector.broadcast %132 : vector<1x8x128xf32> to vector<2x8x128xf32>
    %135 = arith.mulf %133, %134 : vector<2x8x128xf32>
    %136 = arith.addf %128, %135 : vector<2x8x128xf32>
    %c34 = arith.constant 34 : index
    %c0_39 = arith.constant 0 : index
    %137 = vector.load %arg1[%c34, %c0_39] : memref<72x128xf32, #tpu.memory_space<vmem>>, vector<2x128xf32>
    %c136 = arith.constant 136 : index
    %c0_40 = arith.constant 0 : index
    %138 = vector.load %arg2[%c136, %c0_40] : memref<288x128xf32, #tpu.memory_space<vmem>>, vector<8x128xf32>
    %139 = vector.shape_cast %137 : vector<2x128xf32> to vector<2x1x128xf32>
    %140 = vector.shape_cast %138 : vector<8x128xf32> to vector<1x8x128xf32>
    %141 = vector.broadcast %139 : vector<2x1x128xf32> to vector<2x8x128xf32>
    %142 = vector.broadcast %140 : vector<1x8x128xf32> to vector<2x8x128xf32>
    %143 = arith.mulf %141, %142 : vector<2x8x128xf32>
    %144 = arith.addf %136, %143 : vector<2x8x128xf32>
    %c36 = arith.constant 36 : index
    %c0_41 = arith.constant 0 : index
    %145 = vector.load %arg1[%c36, %c0_41] : memref<72x128xf32, #tpu.memory_space<vmem>>, vector<2x128xf32>
    %c144 = arith.constant 144 : index
    %c0_42 = arith.constant 0 : index
    %146 = vector.load %arg2[%c144, %c0_42] : memref<288x128xf32, #tpu.memory_space<vmem>>, vector<8x128xf32>
    %147 = vector.shape_cast %145 : vector<2x128xf32> to vector<2x1x128xf32>
    %148 = vector.shape_cast %146 : vector<8x128xf32> to vector<1x8x128xf32>
    %149 = vector.broadcast %147 : vector<2x1x128xf32> to vector<2x8x128xf32>
    %150 = vector.broadcast %148 : vector<1x8x128xf32> to vector<2x8x128xf32>
    %151 = arith.mulf %149, %150 : vector<2x8x128xf32>
    %152 = arith.addf %144, %151 : vector<2x8x128xf32>
    %c38 = arith.constant 38 : index
    %c0_43 = arith.constant 0 : index
    %153 = vector.load %arg1[%c38, %c0_43] : memref<72x128xf32, #tpu.memory_space<vmem>>, vector<2x128xf32>
    %c152 = arith.constant 152 : index
    %c0_44 = arith.constant 0 : index
    %154 = vector.load %arg2[%c152, %c0_44] : memref<288x128xf32, #tpu.memory_space<vmem>>, vector<8x128xf32>
    %155 = vector.shape_cast %153 : vector<2x128xf32> to vector<2x1x128xf32>
    %156 = vector.shape_cast %154 : vector<8x128xf32> to vector<1x8x128xf32>
    %157 = vector.broadcast %155 : vector<2x1x128xf32> to vector<2x8x128xf32>
    %158 = vector.broadcast %156 : vector<1x8x128xf32> to vector<2x8x128xf32>
    %159 = arith.mulf %157, %158 : vector<2x8x128xf32>
    %160 = arith.addf %152, %159 : vector<2x8x128xf32>
    %c40_45 = arith.constant 40 : index
    %c0_46 = arith.constant 0 : index
    %161 = vector.load %arg1[%c40_45, %c0_46] : memref<72x128xf32, #tpu.memory_space<vmem>>, vector<2x128xf32>
    %c160 = arith.constant 160 : index
    %c0_47 = arith.constant 0 : index
    %162 = vector.load %arg2[%c160, %c0_47] : memref<288x128xf32, #tpu.memory_space<vmem>>, vector<8x128xf32>
    %163 = vector.shape_cast %161 : vector<2x128xf32> to vector<2x1x128xf32>
    %164 = vector.shape_cast %162 : vector<8x128xf32> to vector<1x8x128xf32>
    %165 = vector.broadcast %163 : vector<2x1x128xf32> to vector<2x8x128xf32>
    %166 = vector.broadcast %164 : vector<1x8x128xf32> to vector<2x8x128xf32>
    %167 = arith.mulf %165, %166 : vector<2x8x128xf32>
    %168 = arith.addf %160, %167 : vector<2x8x128xf32>
    %c42 = arith.constant 42 : index
    %c0_48 = arith.constant 0 : index
    %169 = vector.load %arg1[%c42, %c0_48] : memref<72x128xf32, #tpu.memory_space<vmem>>, vector<2x128xf32>
    %c168 = arith.constant 168 : index
    %c0_49 = arith.constant 0 : index
    %170 = vector.load %arg2[%c168, %c0_49] : memref<288x128xf32, #tpu.memory_space<vmem>>, vector<8x128xf32>
    %171 = vector.shape_cast %169 : vector<2x128xf32> to vector<2x1x128xf32>
    %172 = vector.shape_cast %170 : vector<8x128xf32> to vector<1x8x128xf32>
    %173 = vector.broadcast %171 : vector<2x1x128xf32> to vector<2x8x128xf32>
    %174 = vector.broadcast %172 : vector<1x8x128xf32> to vector<2x8x128xf32>
    %175 = arith.mulf %173, %174 : vector<2x8x128xf32>
    %176 = arith.addf %168, %175 : vector<2x8x128xf32>
    %c44 = arith.constant 44 : index
    %c0_50 = arith.constant 0 : index
    %177 = vector.load %arg1[%c44, %c0_50] : memref<72x128xf32, #tpu.memory_space<vmem>>, vector<2x128xf32>
    %c176 = arith.constant 176 : index
    %c0_51 = arith.constant 0 : index
    %178 = vector.load %arg2[%c176, %c0_51] : memref<288x128xf32, #tpu.memory_space<vmem>>, vector<8x128xf32>
    %179 = vector.shape_cast %177 : vector<2x128xf32> to vector<2x1x128xf32>
    %180 = vector.shape_cast %178 : vector<8x128xf32> to vector<1x8x128xf32>
    %181 = vector.broadcast %179 : vector<2x1x128xf32> to vector<2x8x128xf32>
    %182 = vector.broadcast %180 : vector<1x8x128xf32> to vector<2x8x128xf32>
    %183 = arith.mulf %181, %182 : vector<2x8x128xf32>
    %184 = arith.addf %176, %183 : vector<2x8x128xf32>
    %c46 = arith.constant 46 : index
    %c0_52 = arith.constant 0 : index
    %185 = vector.load %arg1[%c46, %c0_52] : memref<72x128xf32, #tpu.memory_space<vmem>>, vector<2x128xf32>
    %c184 = arith.constant 184 : index
    %c0_53 = arith.constant 0 : index
    %186 = vector.load %arg2[%c184, %c0_53] : memref<288x128xf32, #tpu.memory_space<vmem>>, vector<8x128xf32>
    %187 = vector.shape_cast %185 : vector<2x128xf32> to vector<2x1x128xf32>
    %188 = vector.shape_cast %186 : vector<8x128xf32> to vector<1x8x128xf32>
    %189 = vector.broadcast %187 : vector<2x1x128xf32> to vector<2x8x128xf32>
    %190 = vector.broadcast %188 : vector<1x8x128xf32> to vector<2x8x128xf32>
    %191 = arith.mulf %189, %190 : vector<2x8x128xf32>
    %192 = arith.addf %184, %191 : vector<2x8x128xf32>
    %c48_54 = arith.constant 48 : index
    %c0_55 = arith.constant 0 : index
    %193 = vector.load %arg1[%c48_54, %c0_55] : memref<72x128xf32, #tpu.memory_space<vmem>>, vector<2x128xf32>
    %c192 = arith.constant 192 : index
    %c0_56 = arith.constant 0 : index
    %194 = vector.load %arg2[%c192, %c0_56] : memref<288x128xf32, #tpu.memory_space<vmem>>, vector<8x128xf32>
    %195 = vector.shape_cast %193 : vector<2x128xf32> to vector<2x1x128xf32>
    %196 = vector.shape_cast %194 : vector<8x128xf32> to vector<1x8x128xf32>
    %197 = vector.broadcast %195 : vector<2x1x128xf32> to vector<2x8x128xf32>
    %198 = vector.broadcast %196 : vector<1x8x128xf32> to vector<2x8x128xf32>
    %199 = arith.mulf %197, %198 : vector<2x8x128xf32>
    %200 = arith.addf %192, %199 : vector<2x8x128xf32>
    %c50 = arith.constant 50 : index
    %c0_57 = arith.constant 0 : index
    %201 = vector.load %arg1[%c50, %c0_57] : memref<72x128xf32, #tpu.memory_space<vmem>>, vector<2x128xf32>
    %c200 = arith.constant 200 : index
    %c0_58 = arith.constant 0 : index
    %202 = vector.load %arg2[%c200, %c0_58] : memref<288x128xf32, #tpu.memory_space<vmem>>, vector<8x128xf32>
    %203 = vector.shape_cast %201 : vector<2x128xf32> to vector<2x1x128xf32>
    %204 = vector.shape_cast %202 : vector<8x128xf32> to vector<1x8x128xf32>
    %205 = vector.broadcast %203 : vector<2x1x128xf32> to vector<2x8x128xf32>
    %206 = vector.broadcast %204 : vector<1x8x128xf32> to vector<2x8x128xf32>
    %207 = arith.mulf %205, %206 : vector<2x8x128xf32>
    %208 = arith.addf %200, %207 : vector<2x8x128xf32>
    %c52 = arith.constant 52 : index
    %c0_59 = arith.constant 0 : index
    %209 = vector.load %arg1[%c52, %c0_59] : memref<72x128xf32, #tpu.memory_space<vmem>>, vector<2x128xf32>
    %c208 = arith.constant 208 : index
    %c0_60 = arith.constant 0 : index
    %210 = vector.load %arg2[%c208, %c0_60] : memref<288x128xf32, #tpu.memory_space<vmem>>, vector<8x128xf32>
    %211 = vector.shape_cast %209 : vector<2x128xf32> to vector<2x1x128xf32>
    %212 = vector.shape_cast %210 : vector<8x128xf32> to vector<1x8x128xf32>
    %213 = vector.broadcast %211 : vector<2x1x128xf32> to vector<2x8x128xf32>
    %214 = vector.broadcast %212 : vector<1x8x128xf32> to vector<2x8x128xf32>
    %215 = arith.mulf %213, %214 : vector<2x8x128xf32>
    %216 = arith.addf %208, %215 : vector<2x8x128xf32>
    %c54 = arith.constant 54 : index
    %c0_61 = arith.constant 0 : index
    %217 = vector.load %arg1[%c54, %c0_61] : memref<72x128xf32, #tpu.memory_space<vmem>>, vector<2x128xf32>
    %c216 = arith.constant 216 : index
    %c0_62 = arith.constant 0 : index
    %218 = vector.load %arg2[%c216, %c0_62] : memref<288x128xf32, #tpu.memory_space<vmem>>, vector<8x128xf32>
    %219 = vector.shape_cast %217 : vector<2x128xf32> to vector<2x1x128xf32>
    %220 = vector.shape_cast %218 : vector<8x128xf32> to vector<1x8x128xf32>
    %221 = vector.broadcast %219 : vector<2x1x128xf32> to vector<2x8x128xf32>
    %222 = vector.broadcast %220 : vector<1x8x128xf32> to vector<2x8x128xf32>
    %223 = arith.mulf %221, %222 : vector<2x8x128xf32>
    %224 = arith.addf %216, %223 : vector<2x8x128xf32>
    %c56_63 = arith.constant 56 : index
    %c0_64 = arith.constant 0 : index
    %225 = vector.load %arg1[%c56_63, %c0_64] : memref<72x128xf32, #tpu.memory_space<vmem>>, vector<2x128xf32>
    %c224 = arith.constant 224 : index
    %c0_65 = arith.constant 0 : index
    %226 = vector.load %arg2[%c224, %c0_65] : memref<288x128xf32, #tpu.memory_space<vmem>>, vector<8x128xf32>
    %227 = vector.shape_cast %225 : vector<2x128xf32> to vector<2x1x128xf32>
    %228 = vector.shape_cast %226 : vector<8x128xf32> to vector<1x8x128xf32>
    %229 = vector.broadcast %227 : vector<2x1x128xf32> to vector<2x8x128xf32>
    %230 = vector.broadcast %228 : vector<1x8x128xf32> to vector<2x8x128xf32>
    %231 = arith.mulf %229, %230 : vector<2x8x128xf32>
    %232 = arith.addf %224, %231 : vector<2x8x128xf32>
    %c58 = arith.constant 58 : index
    %c0_66 = arith.constant 0 : index
    %233 = vector.load %arg1[%c58, %c0_66] : memref<72x128xf32, #tpu.memory_space<vmem>>, vector<2x128xf32>
    %c232 = arith.constant 232 : index
    %c0_67 = arith.constant 0 : index
    %234 = vector.load %arg2[%c232, %c0_67] : memref<288x128xf32, #tpu.memory_space<vmem>>, vector<8x128xf32>
    %235 = vector.shape_cast %233 : vector<2x128xf32> to vector<2x1x128xf32>
    %236 = vector.shape_cast %234 : vector<8x128xf32> to vector<1x8x128xf32>
    %237 = vector.broadcast %235 : vector<2x1x128xf32> to vector<2x8x128xf32>
    %238 = vector.broadcast %236 : vector<1x8x128xf32> to vector<2x8x128xf32>
    %239 = arith.mulf %237, %238 : vector<2x8x128xf32>
    %240 = arith.addf %232, %239 : vector<2x8x128xf32>
    %c60 = arith.constant 60 : index
    %c0_68 = arith.constant 0 : index
    %241 = vector.load %arg1[%c60, %c0_68] : memref<72x128xf32, #tpu.memory_space<vmem>>, vector<2x128xf32>
    %c240 = arith.constant 240 : index
    %c0_69 = arith.constant 0 : index
    %242 = vector.load %arg2[%c240, %c0_69] : memref<288x128xf32, #tpu.memory_space<vmem>>, vector<8x128xf32>
    %243 = vector.shape_cast %241 : vector<2x128xf32> to vector<2x1x128xf32>
    %244 = vector.shape_cast %242 : vector<8x128xf32> to vector<1x8x128xf32>
    %245 = vector.broadcast %243 : vector<2x1x128xf32> to vector<2x8x128xf32>
    %246 = vector.broadcast %244 : vector<1x8x128xf32> to vector<2x8x128xf32>
    %247 = arith.mulf %245, %246 : vector<2x8x128xf32>
    %248 = arith.addf %240, %247 : vector<2x8x128xf32>
    %c62 = arith.constant 62 : index
    %c0_70 = arith.constant 0 : index
    %249 = vector.load %arg1[%c62, %c0_70] : memref<72x128xf32, #tpu.memory_space<vmem>>, vector<2x128xf32>
    %c248 = arith.constant 248 : index
    %c0_71 = arith.constant 0 : index
    %250 = vector.load %arg2[%c248, %c0_71] : memref<288x128xf32, #tpu.memory_space<vmem>>, vector<8x128xf32>
    %251 = vector.shape_cast %249 : vector<2x128xf32> to vector<2x1x128xf32>
    %252 = vector.shape_cast %250 : vector<8x128xf32> to vector<1x8x128xf32>
    %253 = vector.broadcast %251 : vector<2x1x128xf32> to vector<2x8x128xf32>
    %254 = vector.broadcast %252 : vector<1x8x128xf32> to vector<2x8x128xf32>
    %255 = arith.mulf %253, %254 : vector<2x8x128xf32>
    %256 = arith.addf %248, %255 : vector<2x8x128xf32>
    %c64_72 = arith.constant 64 : index
    %c0_73 = arith.constant 0 : index
    %257 = vector.load %arg1[%c64_72, %c0_73] : memref<72x128xf32, #tpu.memory_space<vmem>>, vector<2x128xf32>
    %c256 = arith.constant 256 : index
    %c0_74 = arith.constant 0 : index
    %258 = vector.load %arg2[%c256, %c0_74] : memref<288x128xf32, #tpu.memory_space<vmem>>, vector<8x128xf32>
    %259 = vector.shape_cast %257 : vector<2x128xf32> to vector<2x1x128xf32>
    %260 = vector.shape_cast %258 : vector<8x128xf32> to vector<1x8x128xf32>
    %261 = vector.broadcast %259 : vector<2x1x128xf32> to vector<2x8x128xf32>
    %262 = vector.broadcast %260 : vector<1x8x128xf32> to vector<2x8x128xf32>
    %263 = arith.mulf %261, %262 : vector<2x8x128xf32>
    %264 = arith.addf %256, %263 : vector<2x8x128xf32>
    %c66 = arith.constant 66 : index
    %c0_75 = arith.constant 0 : index
    %265 = vector.load %arg1[%c66, %c0_75] : memref<72x128xf32, #tpu.memory_space<vmem>>, vector<2x128xf32>
    %c264 = arith.constant 264 : index
    %c0_76 = arith.constant 0 : index
    %266 = vector.load %arg2[%c264, %c0_76] : memref<288x128xf32, #tpu.memory_space<vmem>>, vector<8x128xf32>
    %267 = vector.shape_cast %265 : vector<2x128xf32> to vector<2x1x128xf32>
    %268 = vector.shape_cast %266 : vector<8x128xf32> to vector<1x8x128xf32>
    %269 = vector.broadcast %267 : vector<2x1x128xf32> to vector<2x8x128xf32>
    %270 = vector.broadcast %268 : vector<1x8x128xf32> to vector<2x8x128xf32>
    %271 = arith.mulf %269, %270 : vector<2x8x128xf32>
    %272 = arith.addf %264, %271 : vector<2x8x128xf32>
    %c68 = arith.constant 68 : index
    %c0_77 = arith.constant 0 : index
    %273 = vector.load %arg1[%c68, %c0_77] : memref<72x128xf32, #tpu.memory_space<vmem>>, vector<2x128xf32>
    %c272 = arith.constant 272 : index
    %c0_78 = arith.constant 0 : index
    %274 = vector.load %arg2[%c272, %c0_78] : memref<288x128xf32, #tpu.memory_space<vmem>>, vector<8x128xf32>
    %275 = vector.shape_cast %273 : vector<2x128xf32> to vector<2x1x128xf32>
    %276 = vector.shape_cast %274 : vector<8x128xf32> to vector<1x8x128xf32>
    %277 = vector.broadcast %275 : vector<2x1x128xf32> to vector<2x8x128xf32>
    %278 = vector.broadcast %276 : vector<1x8x128xf32> to vector<2x8x128xf32>
    %279 = arith.mulf %277, %278 : vector<2x8x128xf32>
    %280 = arith.addf %272, %279 : vector<2x8x128xf32>
    %c70 = arith.constant 70 : index
    %c0_79 = arith.constant 0 : index
    %281 = vector.load %arg1[%c70, %c0_79] : memref<72x128xf32, #tpu.memory_space<vmem>>, vector<2x128xf32>
    %c280 = arith.constant 280 : index
    %c0_80 = arith.constant 0 : index
    %282 = vector.load %arg2[%c280, %c0_80] : memref<288x128xf32, #tpu.memory_space<vmem>>, vector<8x128xf32>
    %283 = vector.shape_cast %281 : vector<2x128xf32> to vector<2x1x128xf32>
    %284 = vector.shape_cast %282 : vector<8x128xf32> to vector<1x8x128xf32>
    %285 = vector.broadcast %283 : vector<2x1x128xf32> to vector<2x8x128xf32>
    %286 = vector.broadcast %284 : vector<1x8x128xf32> to vector<2x8x128xf32>
    %287 = arith.mulf %285, %286 : vector<2x8x128xf32>
    %288 = arith.addf %280, %287 : vector<2x8x128xf32>
    %c0_81 = arith.constant 0 : index
    %c0_82 = arith.constant 0 : index
    %289 = vector.load %arg3[%c0_81, %c0_82] : memref<8x128xf32, #tpu.memory_space<vmem>>, vector<8x128xf32>
    %290 = vector.shape_cast %289 : vector<8x128xf32> to vector<1x8x128xf32>
    %291 = vector.broadcast %290 : vector<1x8x128xf32> to vector<2x8x128xf32>
    %292 = arith.addf %288, %291 : vector<2x8x128xf32>
    %c0_83 = arith.constant 0 : index
    %c0_84 = arith.constant 0 : index
    %c0_85 = arith.constant 0 : index
    %293 = vector.load %arg4[%c0_83, %c0_84, %c0_85] : memref<2x8x128xf32, #tpu.memory_space<vmem>>, vector<2x8x128xf32>
    tpu.vector_store %arg4[%c0_83, %c0_84, %c0_85], %292 {strides = array<i32>} : memref<2x8x128xf32, #tpu.memory_space<vmem>>, vector<2x8x128xf32>,
    return
  }
  func.func @transform_0(%arg0: i32) -> (i32, i32) {
    %c0_i32 = arith.constant 0 : i32
    %c0_i32_0 = arith.constant 0 : i32
    return %c0_i32, %arg0 : i32, i32
  }
  func.func @transform_1(%arg0: i32) -> (i32, i32) {
    %c0_i32 = arith.constant 0 : i32
    %c0_i32_0 = arith.constant 0 : i32
    return %c0_i32, %arg0 : i32, i32
  }
  func.func @transform_2(%arg0: i32) -> (i32, i32) {
    %c0_i32 = arith.constant 0 : i32
    %c0_i32_0 = arith.constant 0 : i32
    return %c0_i32, %arg0 : i32, i32
  }
  func.func @transform_3(%arg0: i32) -> (i32, i32, i32) {
    %c0_i32 = arith.constant 0 : i32
    %c0_i32_0 = arith.constant 0 : i32
    %c0_i32_1 = arith.constant 0 : i32
    return %c0_i32, %c0_i32_0, %arg0 : i32, i32, i32
  }
}

</mosaic_0001>

<llo_original>
// kernel: tpu_custom_call.1
$region0: #{tpu_custom_call.1}
  #allocation0 [shape = 'u32[]', space=smem, size = 0x4, offset = 0x4, fixed_abs, tag = 'smem constant byte address 0x4 - core index']
  #allocation1 [shape = 'u32[144,128]{1,0:T(1,128)}', space=vmem, size = 0x12000, scoped, tag = 'internal scratch']
  %s0 = inlined_call_operand.hbm [shape: f32[72,256], index: 0, kind: input, shape index: {}]
  %s1 = inlined_call_operand.hbm [shape: f32[288,256], index: 1, kind: input, shape index: {}]
  %s2 = inlined_call_operand.hbm [shape: f32[8,256], index: 2, kind: input, shape index: {}]
  %s3 = inlined_call_operand.hbm [shape: f32[2,8,256], index: 3, kind: output, shape index: {}]
  %s4 = sld [smem:[#allocation0]]
  $region57: #{tpu_custom_call.1} parent=0
    _
  %s6 = ssub.s32 1, %s4
  %s7 = scalar_select 0, %s6, %s4
  $region1: #{tpu_custom_call.1} parent=0
    #allocation2 [shape = 'u8[73728]{0}', space=vmem, size = 0x12000, scoped, tag = 'input window, operand 0']
    #allocation3 [shape = 's32[2]{0}', space=sflag, size = 0x8, scoped, tag = 'scoped memory for tpu_custom_call.1']
    #allocation4 [shape = 's32[2]{0}', space=sflag, size = 0x8, scoped, tag = 'scoped memory for tpu_custom_call.1']
    #allocation5 [shape = 'u8[294912]{0}', space=vmem, size = 0x48000, scoped, tag = 'input window, operand 1']
    #allocation6 [shape = 's32[2]{0}', space=sflag, size = 0x8, scoped, tag = 'scoped memory for tpu_custom_call.1']
    #allocation7 [shape = 'u8[8192]{0}', space=vmem, size = 0x2000, scoped, tag = 'input window, operand 2']
    #allocation8 [shape = 'u8[16384]{0}', space=vmem, size = 0x4000, scoped, tag = 'output window, operand 0']
    %8 = vsyncpa [#allocation3], 0
    %s9 = scalar_lea.sflag [#allocation3], 1
    %10 = vsyncpa %s9, 0
    %11 = vsyncpa [#allocation6], 0
    %s12 = scalar_lea.sflag [#allocation6], 1
    %13 = vsyncpa %s12, 0
    %14 = vsyncpa [#allocation4], 0
    %s15 = scalar_lea.sflag [#allocation4], 1
    %16 = vsyncpa %s15, 0
    loop: start=0, step=1, limit=4
    $region2: #{tpu_custom_call.1} parent=1 // loop_pre_header
      _
    $region3: #{tpu_custom_call.1} parent=1 // loop_header
      %s18 = sphi 0, %s22
      %p19 = scmp.ge.s32.totalorder %s18, 4
      %s28 = sphi 0, %s30
      %s31 = sphi 0, %s28
      %s32 = sphi 0, %s31
      %s48 = sphi 0, %s32
      %s54 = sphi 0, %s56
      %s57 = sphi 0, %s54
      %s58 = sphi 0, %s57
      %s74 = sphi 0, %s58
      %s80 = sphi 0, %s82
      %s83 = sphi 0, %s80
      %s84 = sphi 0, %s83
      %s100 = sphi 0, %s84
      %s106 = sphi 0, %s108
      %s109 = sphi 0, %s106
      %s110 = sphi 0, %s109
      %s126 = sphi 0, %s110
    $region4: #{tpu_custom_call.1} parent=1 // loop_header_branch
      %21 = sbr.rel (%p19) target = $region8
    $region5: #{tpu_custom_call.1} parent=1 // loop_body
      %s23 = ssub.s32 %s18, 1
      %s24 = ssub.s32 %s18, 2
      %s25 = sadd.s32 %s18, 1
      %s26 = ssub.s32 %s18, %s25
      %p27 = scmp.eq.s32.totalorder %s26, 0
      %s29 = sadd.s32 %s28, 1
      %s30 = scalar_select %p27, %s28, %s29
      %p33 = pneg %p27
      %p34 = scmp.eq.s32.totalorder %s18, 1
      %p35 = por %p33, %p34
      %p36 = scmp.ne.s32.totalorder %s28, %s31
      %p37 = scmp.eq.s32.totalorder %s18, 0
      %p38 = por %p36, %p37
      %p39 = scmp.ne.s32.totalorder %s28, %s31
      %p40 = scmp.eq.s32.totalorder %s23, 1
      %p41 = por %p39, %p40
      %p42 = scmp.ne.s32.totalorder %s31, %s32
      %p43 = scmp.eq.s32.totalorder %s23, 0
      %p44 = por %p42, %p43
      %p45 = scmp.ne.s32.totalorder %s31, %s32
      %p46 = scmp.eq.s32.totalorder %s24, 1
      %p47 = por %p45, %p46
      %p49 = scmp.ne.s32.totalorder %s32, %s48
      %p50 = scmp.eq.s32.totalorder %s24, 0
      %p51 = por %p49, %p50
      %s52 = ssub.s32 %s18, %s25
      %p53 = scmp.eq.s32.totalorder %s52, 0
      %s55 = sadd.s32 %s54, 1
      %s56 = scalar_select %p53, %s54, %s55
      %p59 = pneg %p53
      %p60 = scmp.eq.s32.totalorder %s18, 1
      %p61 = por %p59, %p60
      %p62 = scmp.ne.s32.totalorder %s54, %s57
      %p63 = scmp.eq.s32.totalorder %s18, 0
      %p64 = por %p62, %p63
      %p65 = scmp.ne.s32.totalorder %s54, %s57
      %p66 = scmp.eq.s32.totalorder %s23, 1
      %p67 = por %p65, %p66
      %p68 = scmp.ne.s32.totalorder %s57, %s58
      %p69 = scmp.eq.s32.totalorder %s23, 0
      %p70 = por %p68, %p69
      %p71 = scmp.ne.s32.totalorder %s57, %s58
      %p72 = scmp.eq.s32.totalorder %s24, 1
      %p73 = por %p71, %p72
      %p75 = scmp.ne.s32.totalorder %s58, %s74
      %p76 = scmp.eq.s32.totalorder %s24, 0
      %p77 = por %p75, %p76
      %s78 = ssub.s32 %s18, %s25
      %p79 = scmp.eq.s32.totalorder %s78, 0
      %s81 = sadd.s32 %s80, 1
      %s82 = scalar_select %p79, %s80, %s81
      %p85 = pneg %p79
      %p86 = scmp.eq.s32.totalorder %s18, 1
      %p87 = por %p85, %p86
      %p88 = scmp.ne.s32.totalorder %s80, %s83
      %p89 = scmp.eq.s32.totalorder %s18, 0
      %p90 = por %p88, %p89
      %p91 = scmp.ne.s32.totalorder %s80, %s83
      %p92 = scmp.eq.s32.totalorder %s23, 1
      %p93 = por %p91, %p92
      %p94 = scmp.ne.s32.totalorder %s83, %s84
      %p95 = scmp.eq.s32.totalorder %s23, 0
      %p96 = por %p94, %p95
      %p97 = scmp.ne.s32.totalorder %s83, %s84
      %p98 = scmp.eq.s32.totalorder %s24, 1
      %p99 = por %p97, %p98
      %p101 = scmp.ne.s32.totalorder %s84, %s100
      %p102 = scmp.eq.s32.totalorder %s24, 0
      %p103 = por %p101, %p102
      %s104 = ssub.s32 %s18, %s25
      %p105 = scmp.eq.s32.totalorder %s104, 0
      %s107 = sadd.s32 %s106, 1
      %s108 = scalar_select %p105, %s106, %s107
      %p111 = pneg %p105
      %p112 = scmp.eq.s32.totalorder %s18, 1
      %p113 = por %p111, %p112
      %p114 = scmp.ne.s32.totalorder %s106, %s109
      %p115 = scmp.eq.s32.totalorder %s18, 0
      %p116 = por %p114, %p115
      %p117 = scmp.ne.s32.totalorder %s106, %s109
      %p118 = scmp.eq.s32.totalorder %s23, 1
      %p119 = por %p117, %p118
      %p120 = scmp.ne.s32.totalorder %s109, %s110
      %p121 = scmp.eq.s32.totalorder %s23, 0
      %p122 = por %p120, %p121
      %p123 = scmp.ne.s32.totalorder %s109, %s110
      %p124 = scmp.eq.s32.totalorder %s24, 1
      %p125 = por %p123, %p124
      %p127 = scmp.ne.s32.totalorder %s110, %s126
      %p128 = scmp.eq.s32.totalorder %s24, 0
      %p129 = por %p127, %p128
      %p130 = scmp.le.s32.totalorder 1, %s18
      %p131 = scmp.lt.s32.totalorder %s18, 3
      %p132 = pnand %p130, %p131
      %p133 = pneg %p132
      // Predicated region
      $region9: #{tpu_custom_call.1} parent=5 // pred_check
        _
      $region10: #{tpu_custom_call.1} parent=5 // pred_check_branch
        %135 = sbr.rel (%p132) target = $region12
      $region11: #{tpu_custom_call.1} parent=5 // pred_region
        %s136 = ssub.s32 %s18, 1
      $region12: #{tpu_custom_call.1} parent=5 // pred_fallthru
        _
      %p137 = scmp.lt.s32.totalorder %s18, 2
      // Predicated region
      $region13: #{tpu_custom_call.1} parent=5 // pred_check
        %p138 = pneg %p137
      $region14: #{tpu_custom_call.1} parent=5 // pred_check_branch
        %140 = sbr.rel (%p138) target = $region16
      $region15: #{tpu_custom_call.1} parent=5 // pred_region
        // Predicated region
        $region17: #{tpu_custom_call.1} parent=15 // pred_check
          %p141 = pneg %p38
        $region18: #{tpu_custom_call.1} parent=15 // pred_check_branch
          %143 = sbr.rel (%p141) target = $region20
        $region19: #{tpu_custom_call.1} parent=15 // pred_region
          %s144 = sand.u32 %s28, 1
          %s145 = scalar_lea.sflag [#allocation3], %s144
          %s146 = sand.u32 %s28, 1
          %s147 = smul.addr %s146, 72
          %s148 = scalar_lea.vmem [#allocation2], %s147
          %s150 = ssub.s32 1152, 1152
          %151 = vsyncadd %s145, %s150
          %s152 = smul.addr %s18, 128
          %s153 = scalar_lea.hbm %s0, %s152
          %s154 = sshll.u32 %s148, 4
          %s155 = int_to_ptr.vmem [resolvable:$true] %s154
          %160 = dma.hbm_to_vmem [thread:$0]  %s153, 1152, %s155, %s145, 256, 128, 8
        $region20: #{tpu_custom_call.1} parent=15 // pred_fallthru
          _
        // Predicated region
        $region21: #{tpu_custom_call.1} parent=15 // pred_check
          %p161 = pneg %p64
        $region22: #{tpu_custom_call.1} parent=15 // pred_check_branch
          %163 = sbr.rel (%p161) target = $region24
        $region23: #{tpu_custom_call.1} parent=15 // pred_region
          %s164 = sand.u32 %s18, 1
          %s165 = scalar_lea.sflag [#allocation6], %s164
          %s166 = sand.u32 %s54, 1
          %s167 = smul.addr %s166, 288
          %s168 = scalar_lea.vmem [#allocation5], %s167
          %s170 = ssub.s32 4608, 4608
          %171 = vsyncadd %s165, %s170
          %s172 = smul.addr %s18, 128
          %s173 = scalar_lea.hbm %s1, %s172
          %s174 = sshll.u32 %s168, 4
          %s175 = int_to_ptr.vmem [resolvable:$true] %s174
          %180 = dma.hbm_to_vmem [thread:$0]  %s173, 4608, %s175, %s165, 256, 128, 8
        $region24: #{tpu_custom_call.1} parent=15 // pred_fallthru
          _
        // Predicated region
        $region25: #{tpu_custom_call.1} parent=15 // pred_check
          %p181 = pneg %p90
        $region26: #{tpu_custom_call.1} parent=15 // pred_check_branch
          %183 = sbr.rel (%p181) target = $region28
        $region27: #{tpu_custom_call.1} parent=15 // pred_region
          %s184 = sand.u32 %s18, 1
          %s185 = scalar_lea.sflag [#allocation6], %s184
          %s186 = sand.u32 %s80, 1
          %s187 = smul.addr %s186, 8
          %s188 = scalar_lea.vmem [#allocation7], %s187
          %s190 = ssub.s32 128, 128
          %191 = vsyncadd %s185, %s190
          %s192 = smul.addr %s18, 128
          %s193 = scalar_lea.hbm %s2, %s192
          %s195 = sshll.u32 %s188, 4
          %s196 = int_to_ptr.vmem [resolvable:$true] %s195
          %198 = dma.hbm_to_vmem [thread:$0]  %s193, 128, %s196, %s185
        $region28: #{tpu_custom_call.1} parent=15 // pred_fallthru
          _
      $region16: #{tpu_custom_call.1} parent=5 // pred_fallthru
        _
      %p199 = scmp.le.s32.totalorder 1, %s18
      %p200 = scmp.lt.s32.totalorder %s18, 3
      %p201 = pnand %p199, %p200
      %p202 = pneg %p201
      // Predicated region
      $region29: #{tpu_custom_call.1} parent=5 // pred_check
        _
      $region30: #{tpu_custom_call.1} parent=5 // pred_check_branch
        %204 = sbr.rel (%p201) target = $region32
      $region31: #{tpu_custom_call.1} parent=5 // pred_region
        %s205 = ssub.s32 %s18, 1
        %s206 = sand.u32 %s31, 1
        %s207 = scalar_lea.sflag [#allocation3], %s206
        %s208 = sand.u32 %s31, 1
        %s209 = smul.addr %s208, 72
        %s210 = scalar_lea.vmem [#allocation2], %s209
        // Predicated region
        $region33: #{tpu_custom_call.1} parent=31 // pred_check
          %p211 = pneg %p44
        $region34: #{tpu_custom_call.1} parent=31 // pred_check_branch
          %213 = sbr.rel (%p211) target = $region36
        $region35: #{tpu_custom_call.1} parent=31 // pred_region
          %214 = dma.done %s207, 1152
        $region36: #{tpu_custom_call.1} parent=31 // pred_fallthru
          _
        %s215 = sand.u32 %s23, 1
        %s216 = scalar_lea.sflag [#allocation6], %s215
        %s217 = sand.u32 %s57, 1
        %s218 = smul.addr %s217, 288
        %s219 = scalar_lea.vmem [#allocation5], %s218
        // Predicated region
        $region37: #{tpu_custom_call.1} parent=31 // pred_check
          %p220 = pneg %p70
        $region38: #{tpu_custom_call.1} parent=31 // pred_check_branch
          %222 = sbr.rel (%p220) target = $region40
        $region39: #{tpu_custom_call.1} parent=31 // pred_region
          %223 = dma.done %s216, 4608
        $region40: #{tpu_custom_call.1} parent=31 // pred_fallthru
          _
        %s224 = sand.u32 %s23, 1
        %s225 = scalar_lea.sflag [#allocation6], %s224
        %s226 = sand.u32 %s83, 1
        %s227 = smul.addr %s226, 8
        %s228 = scalar_lea.vmem [#allocation7], %s227
        // Predicated region
        $region41: #{tpu_custom_call.1} parent=31 // pred_check
          %p229 = pneg %p96
        $region42: #{tpu_custom_call.1} parent=31 // pred_check_branch
          %231 = sbr.rel (%p229) target = $region44
        $region43: #{tpu_custom_call.1} parent=31 // pred_region
          %232 = dma.done %s225, 128
        $region44: #{tpu_custom_call.1} parent=31 // pred_fallthru
          _
        %s233 = sand.u32 %s31, 1
        %s234 = scalar_lea.sflag [#allocation3], %s233
        %s235 = sand.u32 %s31, 1
        %s236 = smul.addr %s235, 72
        %s237 = scalar_lea.vmem [#allocation2], %s236
        %p238 = pneg %p44
        %p239 = pneg %p41
        %s240 = sand.u32 %s23, 1
        %s241 = scalar_lea.sflag [#allocation6], %s240
        %s242 = sand.u32 %s57, 1
        %s243 = smul.addr %s242, 288
        %s244 = scalar_lea.vmem [#allocation5], %s243
        %p245 = pneg %p70
        %p246 = pneg %p67
        %s247 = sand.u32 %s23, 1
        %s248 = scalar_lea.sflag [#allocation6], %s247
        %s249 = sand.u32 %s83, 1
        %s250 = smul.addr %s249, 8
        %s251 = scalar_lea.vmem [#allocation7], %s250
        %p252 = pneg %p96
        %p253 = pneg %p93
        %p254 = pneg %p122
        %p255 = pneg %p119
        %s256 = sand.u32 %s109, 1
        %s257 = scalar_lea.sflag [#allocation4], %s256
        %s258 = sand.u32 %s109, 1
        %s259 = smul.addr %s258, 16
        %s260 = scalar_lea.vmem [#allocation8], %s259
        %v261 = vld [vmem:[%s210] sm:$0x3]
        %v262 = vld [vmem:[%s219] sm:$0xff]
        %v265 = vunpack.c.l.s4 1966171168
        %v266 = vunpack.c.0.s8 %v265
        %v267 = vlaneseq
        %v268 = vshrl.u32 %v267, 7
        %v269 = vsub.s32 %v266, %v268
        %v270 = vrot.slane %v261, %v269
        %v271 = vcombine.high %v270, %v270
        %v273 = vunpack.c.l.s4 1966171168
        %v274 = vunpack.c.0.s8 %v273
        %v275 = vlaneseq
        %v276 = vshrl.u32 %v275, 7
        %v277 = vsub.s32 %v274, %v276
        %v278 = vrot.slane %v270, %v277
        %v280 = vunpack.c.l.s4 1966171168
        %v281 = vunpack.c.0.s8 %v280
        %v282 = vlaneseq
        %v283 = vshrl.u32 %v282, 7
        %v284 = vsub.s32 %v281, %v283
        %v285 = vrot.slane %v271, %v284
        %v286 = vlaneseq
        %v287 = vshrl.u32 %v286, 7
        %v288 = vsub.s32 0, %v287
        %v289 = vrot.slane %v278, %v288
        %v290 = vlaneseq
        %v291 = vshrl.u32 %v290, 7
        %v292 = vsub.s32 0, %v291
        %v293 = vrot.slane %v285, %v292
        %v296 = vmul.f32 %v289, %v262
        %v297 = vmul.f32 %v293, %v262
        %v298 = vadd.f32 %v296, 0.0
        %v299 = vadd.f32 %v297, 0.0
        %v300 = vld [vmem:[%s210 + $0x2] sm:$0x3]
        %v301 = vld [vmem:[%s219 + $0x8] sm:$0xff]
        %v304 = vunpack.c.l.s4 1966171168
        %v305 = vunpack.c.0.s8 %v304
        %v306 = vlaneseq
        %v307 = vshrl.u32 %v306, 7
        %v308 = vsub.s32 %v305, %v307
        %v309 = vrot.slane %v300, %v308
        %v310 = vcombine.high %v309, %v309
        %v312 = vunpack.c.l.s4 1966171168
        %v313 = vunpack.c.0.s8 %v312
        %v314 = vlaneseq
        %v315 = vshrl.u32 %v314, 7
        %v316 = vsub.s32 %v313, %v315
        %v317 = vrot.slane %v309, %v316
        %v319 = vunpack.c.l.s4 1966171168
        %v320 = vunpack.c.0.s8 %v319
        %v321 = vlaneseq
        %v322 = vshrl.u32 %v321, 7
        %v323 = vsub.s32 %v320, %v322
        %v324 = vrot.slane %v310, %v323
        %v325 = vlaneseq
        %v326 = vshrl.u32 %v325, 7
        %v327 = vsub.s32 0, %v326
        %v328 = vrot.slane %v317, %v327
        %v329 = vlaneseq
        %v330 = vshrl.u32 %v329, 7
        %v331 = vsub.s32 0, %v330
        %v332 = vrot.slane %v324, %v331
        %v335 = vmul.f32 %v328, %v301
        %v336 = vmul.f32 %v332, %v301
        %v337 = vadd.f32 %v298, %v335
        %v338 = vadd.f32 %v299, %v336
        %v339 = vld [vmem:[%s210 + $0x4] sm:$0x3]
        %v340 = vld [vmem:[%s219 + $0x10] sm:$0xff]
        %v343 = vunpack.c.l.s4 1966171168
        %v344 = vunpack.c.0.s8 %v343
        %v345 = vlaneseq
        %v346 = vshrl.u32 %v345, 7
        %v347 = vsub.s32 %v344, %v346
        %v348 = vrot.slane %v339, %v347
        %v349 = vcombine.high %v348, %v348
        %v351 = vunpack.c.l.s4 1966171168
        %v352 = vunpack.c.0.s8 %v351
        %v353 = vlaneseq
        %v354 = vshrl.u32 %v353, 7
        %v355 = vsub.s32 %v352, %v354
        %v356 = vrot.slane %v348, %v355
        %v358 = vunpack.c.l.s4 1966171168
        %v359 = vunpack.c.0.s8 %v358
        %v360 = vlaneseq
        %v361 = vshrl.u32 %v360, 7
        %v362 = vsub.s32 %v359, %v361
        %v363 = vrot.slane %v349, %v362
        %v364 = vlaneseq
        %v365 = vshrl.u32 %v364, 7
        %v366 = vsub.s32 0, %v365
        %v367 = vrot.slane %v356, %v366
        %v368 = vlaneseq
        %v369 = vshrl.u32 %v368, 7
        %v370 = vsub.s32 0, %v369
        %v371 = vrot.slane %v363, %v370
        %v374 = vmul.f32 %v367, %v340
        %v375 = vmul.f32 %v371, %v340
        %v376 = vadd.f32 %v337, %v374
        %v377 = vadd.f32 %v338, %v375
        %v378 = vld [vmem:[%s210 + $0x6] sm:$0x3]
        %v379 = vld [vmem:[%s219 + $0x18] sm:$0xff]
        %v382 = vunpack.c.l.s4 1966171168
        %v383 = vunpack.c.0.s8 %v382
        %v384 = vlaneseq
        %v385 = vshrl.u32 %v384, 7
        %v386 = vsub.s32 %v383, %v385
        %v387 = vrot.slane %v378, %v386
        %v388 = vcombine.high %v387, %v387
        %v390 = vunpack.c.l.s4 1966171168
        %v391 = vunpack.c.0.s8 %v390
        %v392 = vlaneseq
        %v393 = vshrl.u32 %v392, 7
        %v394 = vsub.s32 %v391, %v393
        %v395 = vrot.slane %v387, %v394
        %v397 = vunpack.c.l.s4 1966171168
        %v398 = vunpack.c.0.s8 %v397
        %v399 = vlaneseq
        %v400 = vshrl.u32 %v399, 7
        %v401 = vsub.s32 %v398, %v400
        %v402 = vrot.slane %v388, %v401
        %v403 = vlaneseq
        %v404 = vshrl.u32 %v403, 7
        %v405 = vsub.s32 0, %v404
        %v406 = vrot.slane %v395, %v405
        %v407 = vlaneseq
        %v408 = vshrl.u32 %v407, 7
        %v409 = vsub.s32 0, %v408
        %v410 = vrot.slane %v402, %v409
        %v413 = vmul.f32 %v406, %v379
        %v414 = vmul.f32 %v410, %v379
        %v415 = vadd.f32 %v376, %v413
        %v416 = vadd.f32 %v377, %v414
        %v417 = vld [vmem:[%s210 + $0x8] sm:$0x3]
        %v418 = vld [vmem:[%s219 + $0x20] sm:$0xff]
        %v421 = vunpack.c.l.s4 1966171168
        %v422 = vunpack.c.0.s8 %v421
        %v423 = vlaneseq
        %v424 = vshrl.u32 %v423, 7
        %v425 = vsub.s32 %v422, %v424
        %v426 = vrot.slane %v417, %v425
        %v427 = vcombine.high %v426, %v426
        %v429 = vunpack.c.l.s4 1966171168
        %v430 = vunpack.c.0.s8 %v429
        %v431 = vlaneseq
        %v432 = vshrl.u32 %v431, 7
        %v433 = vsub.s32 %v430, %v432
        %v434 = vrot.slane %v426, %v433
        %v436 = vunpack.c.l.s4 1966171168
        %v437 = vunpack.c.0.s8 %v436
        %v438 = vlaneseq
        %v439 = vshrl.u32 %v438, 7
        %v440 = vsub.s32 %v437, %v439
        %v441 = vrot.slane %v427, %v440
        %v442 = vlaneseq
        %v443 = vshrl.u32 %v442, 7
        %v444 = vsub.s32 0, %v443
        %v445 = vrot.slane %v434, %v444
        %v446 = vlaneseq
        %v447 = vshrl.u32 %v446, 7
        %v448 = vsub.s32 0, %v447
        %v449 = vrot.slane %v441, %v448
        %v452 = vmul.f32 %v445, %v418
        %v453 = vmul.f32 %v449, %v418
        %v454 = vadd.f32 %v415, %v452
        %v455 = vadd.f32 %v416, %v453
        %v456 = vld [vmem:[%s210 + $0xa] sm:$0x3]
        %v457 = vld [vmem:[%s219 + $0x28] sm:$0xff]
        %v460 = vunpack.c.l.s4 1966171168
        %v461 = vunpack.c.0.s8 %v460
        %v462 = vlaneseq
        %v463 = vshrl.u32 %v462, 7
        %v464 = vsub.s32 %v461, %v463
        %v465 = vrot.slane %v456, %v464
        %v466 = vcombine.high %v465, %v465
        %v468 = vunpack.c.l.s4 1966171168
        %v469 = vunpack.c.0.s8 %v468
        %v470 = vlaneseq
        %v471 = vshrl.u32 %v470, 7
        %v472 = vsub.s32 %v469, %v471
        %v473 = vrot.slane %v465, %v472
        %v475 = vunpack.c.l.s4 1966171168
        %v476 = vunpack.c.0.s8 %v475
        %v477 = vlaneseq
        %v478 = vshrl.u32 %v477, 7
        %v479 = vsub.s32 %v476, %v478
        %v480 = vrot.slane %v466, %v479
        %v481 = vlaneseq
        %v482 = vshrl.u32 %v481, 7
        %v483 = vsub.s32 0, %v482
        %v484 = vrot.slane %v473, %v483
        %v485 = vlaneseq
        %v486 = vshrl.u32 %v485, 7
        %v487 = vsub.s32 0, %v486
        %v488 = vrot.slane %v480, %v487
        %v491 = vmul.f32 %v484, %v457
        %v492 = vmul.f32 %v488, %v457
        %v493 = vadd.f32 %v454, %v491
        %v494 = vadd.f32 %v455, %v492
        %v495 = vld [vmem:[%s210 + $0xc] sm:$0x3]
        %v496 = vld [vmem:[%s219 + $0x30] sm:$0xff]
        %v499 = vunpack.c.l.s4 1966171168
        %v500 = vunpack.c.0.s8 %v499
        %v501 = vlaneseq
        %v502 = vshrl.u32 %v501, 7
        %v503 = vsub.s32 %v500, %v502
        %v504 = vrot.slane %v495, %v503
        %v505 = vcombine.high %v504, %v504
        %v507 = vunpack.c.l.s4 1966171168
        %v508 = vunpack.c.0.s8 %v507
        %v509 = vlaneseq
        %v510 = vshrl.u32 %v509, 7
        %v511 = vsub.s32 %v508, %v510
        %v512 = vrot.slane %v504, %v511
        %v514 = vunpack.c.l.s4 1966171168
        %v515 = vunpack.c.0.s8 %v514
        %v516 = vlaneseq
        %v517 = vshrl.u32 %v516, 7
        %v518 = vsub.s32 %v515, %v517
        %v519 = vrot.slane %v505, %v518
        %v520 = vlaneseq
        %v521 = vshrl.u32 %v520, 7
        %v522 = vsub.s32 0, %v521
        %v523 = vrot.slane %v512, %v522
        %v524 = vlaneseq
        %v525 = vshrl.u32 %v524, 7
        %v526 = vsub.s32 0, %v525
        %v527 = vrot.slane %v519, %v526
        %v530 = vmul.f32 %v523, %v496
        %v531 = vmul.f32 %v527, %v496
        %v532 = vadd.f32 %v493, %v530
        %v533 = vadd.f32 %v494, %v531
        %v534 = vld [vmem:[%s210 + $0xe] sm:$0x3]
        %v535 = vld [vmem:[%s219 + $0x38] sm:$0xff]
        %v538 = vunpack.c.l.s4 1966171168
        %v539 = vunpack.c.0.s8 %v538
        %v540 = vlaneseq
        %v541 = vshrl.u32 %v540, 7
        %v542 = vsub.s32 %v539, %v541
        %v543 = vrot.slane %v534, %v542
        %v544 = vcombine.high %v543, %v543
        %v546 = vunpack.c.l.s4 1966171168
        %v547 = vunpack.c.0.s8 %v546
        %v548 = vlaneseq
        %v549 = vshrl.u32 %v548, 7
        %v550 = vsub.s32 %v547, %v549
        %v551 = vrot.slane %v543, %v550
        %v553 = vunpack.c.l.s4 1966171168
        %v554 = vunpack.c.0.s8 %v553
        %v555 = vlaneseq
        %v556 = vshrl.u32 %v555, 7
        %v557 = vsub.s32 %v554, %v556
        %v558 = vrot.slane %v544, %v557
        %v559 = vlaneseq
        %v560 = vshrl.u32 %v559, 7
        %v561 = vsub.s32 0, %v560
        %v562 = vrot.slane %v551, %v561
        %v563 = vlaneseq
        %v564 = vshrl.u32 %v563, 7
        %v565 = vsub.s32 0, %v564
        %v566 = vrot.slane %v558, %v565
        %v569 = vmul.f32 %v562, %v535
        %v570 = vmul.f32 %v566, %v535
        %v571 = vadd.f32 %v532, %v569
        %v572 = vadd.f32 %v533, %v570
        %v573 = vld [vmem:[%s210 + $0x10] sm:$0x3]
        %v574 = vld [vmem:[%s219 + $0x40] sm:$0xff]
        %v577 = vunpack.c.l.s4 1966171168
        %v578 = vunpack.c.0.s8 %v577
        %v579 = vlaneseq
        %v580 = vshrl.u32 %v579, 7
        %v581 = vsub.s32 %v578, %v580
        %v582 = vrot.slane %v573, %v581
        %v583 = vcombine.high %v582, %v582
        %v585 = vunpack.c.l.s4 1966171168
        %v586 = vunpack.c.0.s8 %v585
        %v587 = vlaneseq
        %v588 = vshrl.u32 %v587, 7
        %v589 = vsub.s32 %v586, %v588
        %v590 = vrot.slane %v582, %v589
        %v592 = vunpack.c.l.s4 1966171168
        %v593 = vunpack.c.0.s8 %v592
        %v594 = vlaneseq
        %v595 = vshrl.u32 %v594, 7
        %v596 = vsub.s32 %v593, %v595
        %v597 = vrot.slane %v583, %v596
        %v598 = vlaneseq
        %v599 = vshrl.u32 %v598, 7
        %v600 = vsub.s32 0, %v599
        %v601 = vrot.slane %v590, %v600
        %v602 = vlaneseq
        %v603 = vshrl.u32 %v602, 7
        %v604 = vsub.s32 0, %v603
        %v605 = vrot.slane %v597, %v604
        %v608 = vmul.f32 %v601, %v574
        %v609 = vmul.f32 %v605, %v574
        %v610 = vadd.f32 %v571, %v608
        %v611 = vadd.f32 %v572, %v609
        %v612 = vld [vmem:[%s210 + $0x12] sm:$0x3]
        %v613 = vld [vmem:[%s219 + $0x48] sm:$0xff]
        %v616 = vunpack.c.l.s4 1966171168
        %v617 = vunpack.c.0.s8 %v616
        %v618 = vlaneseq
        %v619 = vshrl.u32 %v618, 7
        %v620 = vsub.s32 %v617, %v619
        %v621 = vrot.slane %v612, %v620
        %v622 = vcombine.high %v621, %v621
        %v624 = vunpack.c.l.s4 1966171168
        %v625 = vunpack.c.0.s8 %v624
        %v626 = vlaneseq
        %v627 = vshrl.u32 %v626, 7
        %v628 = vsub.s32 %v625, %v627
        %v629 = vrot.slane %v621, %v628
        %v631 = vunpack.c.l.s4 1966171168
        %v632 = vunpack.c.0.s8 %v631
        %v633 = vlaneseq
        %v634 = vshrl.u32 %v633, 7
        %v635 = vsub.s32 %v632, %v634
        %v636 = vrot.slane %v622, %v635
        %v637 = vlaneseq
        %v638 = vshrl.u32 %v637, 7
        %v639 = vsub.s32 0, %v638
        %v640 = vrot.slane %v629, %v639
        %v641 = vlaneseq
        %v642 = vshrl.u32 %v641, 7
        %v643 = vsub.s32 0, %v642
        %v644 = vrot.slane %v636, %v643
        %v647 = vmul.f32 %v640, %v613
        %v648 = vmul.f32 %v644, %v613
        %v649 = vadd.f32 %v610, %v647
        %v650 = vadd.f32 %v611, %v648
        %v651 = vld [vmem:[%s210 + $0x14] sm:$0x3]
        %v652 = vld [vmem:[%s219 + $0x50] sm:$0xff]
        %v655 = vunpack.c.l.s4 1966171168
        %v656 = vunpack.c.0.s8 %v655
        %v657 = vlaneseq
        %v658 = vshrl.u32 %v657, 7
        %v659 = vsub.s32 %v656, %v658
        %v660 = vrot.slane %v651, %v659
        %v661 = vcombine.high %v660, %v660
        %v663 = vunpack.c.l.s4 1966171168
        %v664 = vunpack.c.0.s8 %v663
        %v665 = vlaneseq
        %v666 = vshrl.u32 %v665, 7
        %v667 = vsub.s32 %v664, %v666
        %v668 = vrot.slane %v660, %v667
        %v670 = vunpack.c.l.s4 1966171168
        %v671 = vunpack.c.0.s8 %v670
        %v672 = vlaneseq
        %v673 = vshrl.u32 %v672, 7
        %v674 = vsub.s32 %v671, %v673
        %v675 = vrot.slane %v661, %v674
        %v676 = vlaneseq
        %v677 = vshrl.u32 %v676, 7
        %v678 = vsub.s32 0, %v677
        %v679 = vrot.slane %v668, %v678
        %v680 = vlaneseq
        %v681 = vshrl.u32 %v680, 7
        %v682 = vsub.s32 0, %v681
        %v683 = vrot.slane %v675, %v682
        %v686 = vmul.f32 %v679, %v652
        %v687 = vmul.f32 %v683, %v652
        %v688 = vadd.f32 %v649, %v686
        %v689 = vadd.f32 %v650, %v687
        %v690 = vld [vmem:[%s210 + $0x16] sm:$0x3]
        %v691 = vld [vmem:[%s219 + $0x58] sm:$0xff]
        %v694 = vunpack.c.l.s4 1966171168
        %v695 = vunpack.c.0.s8 %v694
        %v696 = vlaneseq
        %v697 = vshrl.u32 %v696, 7
        %v698 = vsub.s32 %v695, %v697
        %v699 = vrot.slane %v690, %v698
        %v700 = vcombine.high %v699, %v699
        %v702 = vunpack.c.l.s4 1966171168
        %v703 = vunpack.c.0.s8 %v702
        %v704 = vlaneseq
        %v705 = vshrl.u32 %v704, 7
        %v706 = vsub.s32 %v703, %v705
        %v707 = vrot.slane %v699, %v706
        %v709 = vunpack.c.l.s4 1966171168
        %v710 = vunpack.c.0.s8 %v709
        %v711 = vlaneseq
        %v712 = vshrl.u32 %v711, 7
        %v713 = vsub.s32 %v710, %v712
        %v714 = vrot.slane %v700, %v713
        %v715 = vlaneseq
        %v716 = vshrl.u32 %v715, 7
        %v717 = vsub.s32 0, %v716
        %v718 = vrot.slane %v707, %v717
        %v719 = vlaneseq
        %v720 = vshrl.u32 %v719, 7
        %v721 = vsub.s32 0, %v720
        %v722 = vrot.slane %v714, %v721
        %v725 = vmul.f32 %v718, %v691
        %v726 = vmul.f32 %v722, %v691
        %v727 = vadd.f32 %v688, %v725
        %v728 = vadd.f32 %v689, %v726
        %v729 = vld [vmem:[%s210 + $0x18] sm:$0x3]
        %v730 = vld [vmem:[%s219 + $0x60] sm:$0xff]
        %v733 = vunpack.c.l.s4 1966171168
        %v734 = vunpack.c.0.s8 %v733
        %v735 = vlaneseq
        %v736 = vshrl.u32 %v735, 7
        %v737 = vsub.s32 %v734, %v736
        %v738 = vrot.slane %v729, %v737
        %v739 = vcombine.high %v738, %v738
        %v741 = vunpack.c.l.s4 1966171168
        %v742 = vunpack.c.0.s8 %v741
        %v743 = vlaneseq
        %v744 = vshrl.u32 %v743, 7
        %v745 = vsub.s32 %v742, %v744
        %v746 = vrot.slane %v738, %v745
        %v748 = vunpack.c.l.s4 1966171168
        %v749 = vunpack.c.0.s8 %v748
        %v750 = vlaneseq
        %v751 = vshrl.u32 %v750, 7
        %v752 = vsub.s32 %v749, %v751
        %v753 = vrot.slane %v739, %v752
        %v754 = vlaneseq
        %v755 = vshrl.u32 %v754, 7
        %v756 = vsub.s32 0, %v755
        %v757 = vrot.slane %v746, %v756
        %v758 = vlaneseq
        %v759 = vshrl.u32 %v758, 7
        %v760 = vsub.s32 0, %v759
        %v761 = vrot.slane %v753, %v760
        %v764 = vmul.f32 %v757, %v730
        %v765 = vmul.f32 %v761, %v730
        %v766 = vadd.f32 %v727, %v764
        %v767 = vadd.f32 %v728, %v765
        %v768 = vld [vmem:[%s210 + $0x1a] sm:$0x3]
        %v769 = vld [vmem:[%s219 + $0x68] sm:$0xff]
        %v772 = vunpack.c.l.s4 1966171168
        %v773 = vunpack.c.0.s8 %v772
        %v774 = vlaneseq
        %v775 = vshrl.u32 %v774, 7
        %v776 = vsub.s32 %v773, %v775
        %v777 = vrot.slane %v768, %v776
        %v778 = vcombine.high %v777, %v777
        %v780 = vunpack.c.l.s4 1966171168
        %v781 = vunpack.c.0.s8 %v780
        %v782 = vlaneseq
        %v783 = vshrl.u32 %v782, 7
        %v784 = vsub.s32 %v781, %v783
        %v785 = vrot.slane %v777, %v784
        %v787 = vunpack.c.l.s4 1966171168
        %v788 = vunpack.c.0.s8 %v787
        %v789 = vlaneseq
        %v790 = vshrl.u32 %v789, 7
        %v791 = vsub.s32 %v788, %v790
        %v792 = vrot.slane %v778, %v791
        %v793 = vlaneseq
        %v794 = vshrl.u32 %v793, 7
        %v795 = vsub.s32 0, %v794
        %v796 = vrot.slane %v785, %v795
        %v797 = vlaneseq
        %v798 = vshrl.u32 %v797, 7
        %v799 = vsub.s32 0, %v798
        %v800 = vrot.slane %v792, %v799
        %v803 = vmul.f32 %v796, %v769
        %v804 = vmul.f32 %v800, %v769
        %v805 = vadd.f32 %v766, %v803
        %v806 = vadd.f32 %v767, %v804
        %v807 = vld [vmem:[%s210 + $0x1c] sm:$0x3]
        %v808 = vld [vmem:[%s219 + $0x70] sm:$0xff]
        %v811 = vunpack.c.l.s4 1966171168
        %v812 = vunpack.c.0.s8 %v811
        %v813 = vlaneseq
        %v814 = vshrl.u32 %v813, 7
        %v815 = vsub.s32 %v812, %v814
        %v816 = vrot.slane %v807, %v815
        %v817 = vcombine.high %v816, %v816
        %v819 = vunpack.c.l.s4 1966171168
        %v820 = vunpack.c.0.s8 %v819
        %v821 = vlaneseq
        %v822 = vshrl.u32 %v821, 7
        %v823 = vsub.s32 %v820, %v822
        %v824 = vrot.slane %v816, %v823
        %v826 = vunpack.c.l.s4 1966171168
        %v827 = vunpack.c.0.s8 %v826
        %v828 = vlaneseq
        %v829 = vshrl.u32 %v828, 7
        %v830 = vsub.s32 %v827, %v829
        %v831 = vrot.slane %v817, %v830
        %v832 = vlaneseq
        %v833 = vshrl.u32 %v832, 7
        %v834 = vsub.s32 0, %v833
        %v835 = vrot.slane %v824, %v834
        %v836 = vlaneseq
        %v837 = vshrl.u32 %v836, 7
        %v838 = vsub.s32 0, %v837
        %v839 = vrot.slane %v831, %v838
        %v842 = vmul.f32 %v835, %v808
        %v843 = vmul.f32 %v839, %v808
        %v844 = vadd.f32 %v805, %v842
        %v845 = vadd.f32 %v806, %v843
        %v846 = vld [vmem:[%s210 + $0x1e] sm:$0x3]
        %v847 = vld [vmem:[%s219 + $0x78] sm:$0xff]
        %v850 = vunpack.c.l.s4 1966171168
        %v851 = vunpack.c.0.s8 %v850
        %v852 = vlaneseq
        %v853 = vshrl.u32 %v852, 7
        %v854 = vsub.s32 %v851, %v853
        %v855 = vrot.slane %v846, %v854
        %v856 = vcombine.high %v855, %v855
        %v858 = vunpack.c.l.s4 1966171168
        %v859 = vunpack.c.0.s8 %v858
        %v860 = vlaneseq
        %v861 = vshrl.u32 %v860, 7
        %v862 = vsub.s32 %v859, %v861
        %v863 = vrot.slane %v855, %v862
        %v865 = vunpack.c.l.s4 1966171168
        %v866 = vunpack.c.0.s8 %v865
        %v867 = vlaneseq
        %v868 = vshrl.u32 %v867, 7
        %v869 = vsub.s32 %v866, %v868
        %v870 = vrot.slane %v856, %v869
        %v871 = vlaneseq
        %v872 = vshrl.u32 %v871, 7
        %v873 = vsub.s32 0, %v872
        %v874 = vrot.slane %v863, %v873
        %v875 = vlaneseq
        %v876 = vshrl.u32 %v875, 7
        %v877 = vsub.s32 0, %v876
        %v878 = vrot.slane %v870, %v877
        %v881 = vmul.f32 %v874, %v847
        %v882 = vmul.f32 %v878, %v847
        %v883 = vadd.f32 %v844, %v881
        %v884 = vadd.f32 %v845, %v882
        %v885 = vld [vmem:[%s210 + $0x20] sm:$0x3]
        %v886 = vld [vmem:[%s219 + $0x80] sm:$0xff]
        %v889 = vunpack.c.l.s4 1966171168
        %v890 = vunpack.c.0.s8 %v889
        %v891 = vlaneseq
        %v892 = vshrl.u32 %v891, 7
        %v893 = vsub.s32 %v890, %v892
        %v894 = vrot.slane %v885, %v893
        %v895 = vcombine.high %v894, %v894
        %v897 = vunpack.c.l.s4 1966171168
        %v898 = vunpack.c.0.s8 %v897
        %v899 = vlaneseq
        %v900 = vshrl.u32 %v899, 7
        %v901 = vsub.s32 %v898, %v900
        %v902 = vrot.slane %v894, %v901
        %v904 = vunpack.c.l.s4 1966171168
        %v905 = vunpack.c.0.s8 %v904
        %v906 = vlaneseq
        %v907 = vshrl.u32 %v906, 7
        %v908 = vsub.s32 %v905, %v907
        %v909 = vrot.slane %v895, %v908
        %v910 = vlaneseq
        %v911 = vshrl.u32 %v910, 7
        %v912 = vsub.s32 0, %v911
        %v913 = vrot.slane %v902, %v912
        %v914 = vlaneseq
        %v915 = vshrl.u32 %v914, 7
        %v916 = vsub.s32 0, %v915
        %v917 = vrot.slane %v909, %v916
        %v920 = vmul.f32 %v913, %v886
        %v921 = vmul.f32 %v917, %v886
        %v922 = vadd.f32 %v883, %v920
        %v923 = vadd.f32 %v884, %v921
        %v924 = vld [vmem:[%s210 + $0x22] sm:$0x3]
        %v925 = vld [vmem:[%s219 + $0x88] sm:$0xff]
        %v928 = vunpack.c.l.s4 1966171168
        %v929 = vunpack.c.0.s8 %v928
        %v930 = vlaneseq
        %v931 = vshrl.u32 %v930, 7
        %v932 = vsub.s32 %v929, %v931
        %v933 = vrot.slane %v924, %v932
        %v934 = vcombine.high %v933, %v933
        %v936 = vunpack.c.l.s4 1966171168
        %v937 = vunpack.c.0.s8 %v936
        %v938 = vlaneseq
        %v939 = vshrl.u32 %v938, 7
        %v940 = vsub.s32 %v937, %v939
        %v941 = vrot.slane %v933, %v940
        %v943 = vunpack.c.l.s4 1966171168
        %v944 = vunpack.c.0.s8 %v943
        %v945 = vlaneseq
        %v946 = vshrl.u32 %v945, 7
        %v947 = vsub.s32 %v944, %v946
        %v948 = vrot.slane %v934, %v947
        %v949 = vlaneseq
        %v950 = vshrl.u32 %v949, 7
        %v951 = vsub.s32 0, %v950
        %v952 = vrot.slane %v941, %v951
        %v953 = vlaneseq
        %v954 = vshrl.u32 %v953, 7
        %v955 = vsub.s32 0, %v954
        %v956 = vrot.slane %v948, %v955
        %v959 = vmul.f32 %v952, %v925
        %v960 = vmul.f32 %v956, %v925
        %v961 = vadd.f32 %v922, %v959
        %v962 = vadd.f32 %v923, %v960
        %v963 = vld [vmem:[%s210 + $0x24] sm:$0x3]
        %v964 = vld [vmem:[%s219 + $0x90] sm:$0xff]
        %v967 = vunpack.c.l.s4 1966171168
        %v968 = vunpack.c.0.s8 %v967
        %v969 = vlaneseq
        %v970 = vshrl.u32 %v969, 7
        %v971 = vsub.s32 %v968, %v970
        %v972 = vrot.slane %v963, %v971
        %v973 = vcombine.high %v972, %v972
        %v975 = vunpack.c.l.s4 1966171168
        %v976 = vunpack.c.0.s8 %v975
        %v977 = vlaneseq
        %v978 = vshrl.u32 %v977, 7
        %v979 = vsub.s32 %v976, %v978
        %v980 = vrot.slane %v972, %v979
        %v982 = vunpack.c.l.s4 1966171168
        %v983 = vunpack.c.0.s8 %v982
        %v984 = vlaneseq
        %v985 = vshrl.u32 %v984, 7
        %v986 = vsub.s32 %v983, %v985
        %v987 = vrot.slane %v973, %v986
        %v988 = vlaneseq
        %v989 = vshrl.u32 %v988, 7
        %v990 = vsub.s32 0, %v989
        %v991 = vrot.slane %v980, %v990
        %v992 = vlaneseq
        %v993 = vshrl.u32 %v992, 7
        %v994 = vsub.s32 0, %v993
        %v995 = vrot.slane %v987, %v994
        %v998 = vmul.f32 %v991, %v964
        %v999 = vmul.f32 %v995, %v964
        %v1000 = vadd.f32 %v961, %v998
        %v1001 = vadd.f32 %v962, %v999
        %v1002 = vld [vmem:[%s210 + $0x26] sm:$0x3]
        %v1003 = vld [vmem:[%s219 + $0x98] sm:$0xff]
        %v1006 = vunpack.c.l.s4 1966171168
        %v1007 = vunpack.c.0.s8 %v1006
        %v1008 = vlaneseq
        %v1009 = vshrl.u32 %v1008, 7
        %v1010 = vsub.s32 %v1007, %v1009
        %v1011 = vrot.slane %v1002, %v1010
        %v1012 = vcombine.high %v1011, %v1011
        %v1014 = vunpack.c.l.s4 1966171168
        %v1015 = vunpack.c.0.s8 %v1014
        %v1016 = vlaneseq
        %v1017 = vshrl.u32 %v1016, 7
        %v1018 = vsub.s32 %v1015, %v1017
        %v1019 = vrot.slane %v1011, %v1018
        %v1021 = vunpack.c.l.s4 1966171168
        %v1022 = vunpack.c.0.s8 %v1021
        %v1023 = vlaneseq
        %v1024 = vshrl.u32 %v1023, 7
        %v1025 = vsub.s32 %v1022, %v1024
        %v1026 = vrot.slane %v1012, %v1025
        %v1027 = vlaneseq
        %v1028 = vshrl.u32 %v1027, 7
        %v1029 = vsub.s32 0, %v1028
        %v1030 = vrot.slane %v1019, %v1029
        %v1031 = vlaneseq
        %v1032 = vshrl.u32 %v1031, 7
        %v1033 = vsub.s32 0, %v1032
        %v1034 = vrot.slane %v1026, %v1033
        %v1037 = vmul.f32 %v1030, %v1003
        %v1038 = vmul.f32 %v1034, %v1003
        %v1039 = vadd.f32 %v1000, %v1037
        %v1040 = vadd.f32 %v1001, %v1038
        %v1041 = vld [vmem:[%s210 + $0x28] sm:$0x3]
        %v1042 = vld [vmem:[%s219 + $0xa0] sm:$0xff]
        %v1045 = vunpack.c.l.s4 1966171168
        %v1046 = vunpack.c.0.s8 %v1045
        %v1047 = vlaneseq
        %v1048 = vshrl.u32 %v1047, 7
        %v1049 = vsub.s32 %v1046, %v1048
        %v1050 = vrot.slane %v1041, %v1049
        %v1051 = vcombine.high %v1050, %v1050
        %v1053 = vunpack.c.l.s4 1966171168
        %v1054 = vunpack.c.0.s8 %v1053
        %v1055 = vlaneseq
        %v1056 = vshrl.u32 %v1055, 7
        %v1057 = vsub.s32 %v1054, %v1056
        %v1058 = vrot.slane %v1050, %v1057
        %v1060 = vunpack.c.l.s4 1966171168
        %v1061 = vunpack.c.0.s8 %v1060
        %v1062 = vlaneseq
        %v1063 = vshrl.u32 %v1062, 7
        %v1064 = vsub.s32 %v1061, %v1063
        %v1065 = vrot.slane %v1051, %v1064
        %v1066 = vlaneseq
        %v1067 = vshrl.u32 %v1066, 7
        %v1068 = vsub.s32 0, %v1067
        %v1069 = vrot.slane %v1058, %v1068
        %v1070 = vlaneseq
        %v1071 = vshrl.u32 %v1070, 7
        %v1072 = vsub.s32 0, %v1071
        %v1073 = vrot.slane %v1065, %v1072
        %v1076 = vmul.f32 %v1069, %v1042
        %v1077 = vmul.f32 %v1073, %v1042
        %v1078 = vadd.f32 %v1039, %v1076
        %v1079 = vadd.f32 %v1040, %v1077
        %v1080 = vld [vmem:[%s210 + $0x2a] sm:$0x3]
        %v1081 = vld [vmem:[%s219 + $0xa8] sm:$0xff]
        %v1084 = vunpack.c.l.s4 1966171168
        %v1085 = vunpack.c.0.s8 %v1084
        %v1086 = vlaneseq
        %v1087 = vshrl.u32 %v1086, 7
        %v1088 = vsub.s32 %v1085, %v1087
        %v1089 = vrot.slane %v1080, %v1088
        %v1090 = vcombine.high %v1089, %v1089
        %v1092 = vunpack.c.l.s4 1966171168
        %v1093 = vunpack.c.0.s8 %v1092
        %v1094 = vlaneseq
        %v1095 = vshrl.u32 %v1094, 7
        %v1096 = vsub.s32 %v1093, %v1095
        %v1097 = vrot.slane %v1089, %v1096
        %v1099 = vunpack.c.l.s4 1966171168
        %v1100 = vunpack.c.0.s8 %v1099
        %v1101 = vlaneseq
        %v1102 = vshrl.u32 %v1101, 7
        %v1103 = vsub.s32 %v1100, %v1102
        %v1104 = vrot.slane %v1090, %v1103
        %v1105 = vlaneseq
        %v1106 = vshrl.u32 %v1105, 7
        %v1107 = vsub.s32 0, %v1106
        %v1108 = vrot.slane %v1097, %v1107
        %v1109 = vlaneseq
        %v1110 = vshrl.u32 %v1109, 7
        %v1111 = vsub.s32 0, %v1110
        %v1112 = vrot.slane %v1104, %v1111
        %v1115 = vmul.f32 %v1108, %v1081
        %v1116 = vmul.f32 %v1112, %v1081
        %v1117 = vadd.f32 %v1078, %v1115
        %v1118 = vadd.f32 %v1079, %v1116
        %v1119 = vld [vmem:[%s210 + $0x2c] sm:$0x3]
        %v1120 = vld [vmem:[%s219 + $0xb0] sm:$0xff]
        %v1123 = vunpack.c.l.s4 1966171168
        %v1124 = vunpack.c.0.s8 %v1123
        %v1125 = vlaneseq
        %v1126 = vshrl.u32 %v1125, 7
        %v1127 = vsub.s32 %v1124, %v1126
        %v1128 = vrot.slane %v1119, %v1127
        %v1129 = vcombine.high %v1128, %v1128
        %v1131 = vunpack.c.l.s4 1966171168
        %v1132 = vunpack.c.0.s8 %v1131
        %v1133 = vlaneseq
        %v1134 = vshrl.u32 %v1133, 7
        %v1135 = vsub.s32 %v1132, %v1134
        %v1136 = vrot.slane %v1128, %v1135
        %v1138 = vunpack.c.l.s4 1966171168
        %v1139 = vunpack.c.0.s8 %v1138
        %v1140 = vlaneseq
        %v1141 = vshrl.u32 %v1140, 7
        %v1142 = vsub.s32 %v1139, %v1141
        %v1143 = vrot.slane %v1129, %v1142
        %v1144 = vlaneseq
        %v1145 = vshrl.u32 %v1144, 7
        %v1146 = vsub.s32 0, %v1145
        %v1147 = vrot.slane %v1136, %v1146
        %v1148 = vlaneseq
        %v1149 = vshrl.u32 %v1148, 7
        %v1150 = vsub.s32 0, %v1149
        %v1151 = vrot.slane %v1143, %v1150
        %v1154 = vmul.f32 %v1147, %v1120
        %v1155 = vmul.f32 %v1151, %v1120
        %v1156 = vadd.f32 %v1117, %v1154
        %v1157 = vadd.f32 %v1118, %v1155
        %v1158 = vld [vmem:[%s210 + $0x2e] sm:$0x3]
        %v1159 = vld [vmem:[%s219 + $0xb8] sm:$0xff]
        %v1162 = vunpack.c.l.s4 1966171168
        %v1163 = vunpack.c.0.s8 %v1162
        %v1164 = vlaneseq
        %v1165 = vshrl.u32 %v1164, 7
        %v1166 = vsub.s32 %v1163, %v1165
        %v1167 = vrot.slane %v1158, %v1166
        %v1168 = vcombine.high %v1167, %v1167
        %v1170 = vunpack.c.l.s4 1966171168
        %v1171 = vunpack.c.0.s8 %v1170
        %v1172 = vlaneseq
        %v1173 = vshrl.u32 %v1172, 7
        %v1174 = vsub.s32 %v1171, %v1173
        %v1175 = vrot.slane %v1167, %v1174
        %v1177 = vunpack.c.l.s4 1966171168
        %v1178 = vunpack.c.0.s8 %v1177
        %v1179 = vlaneseq
        %v1180 = vshrl.u32 %v1179, 7
        %v1181 = vsub.s32 %v1178, %v1180
        %v1182 = vrot.slane %v1168, %v1181
        %v1183 = vlaneseq
        %v1184 = vshrl.u32 %v1183, 7
        %v1185 = vsub.s32 0, %v1184
        %v1186 = vrot.slane %v1175, %v1185
        %v1187 = vlaneseq
        %v1188 = vshrl.u32 %v1187, 7
        %v1189 = vsub.s32 0, %v1188
        %v1190 = vrot.slane %v1182, %v1189
        %v1193 = vmul.f32 %v1186, %v1159
        %v1194 = vmul.f32 %v1190, %v1159
        %v1195 = vadd.f32 %v1156, %v1193
        %v1196 = vadd.f32 %v1157, %v1194
        %v1197 = vld [vmem:[%s210 + $0x30] sm:$0x3]
        %v1198 = vld [vmem:[%s219 + $0xc0] sm:$0xff]
        %v1201 = vunpack.c.l.s4 1966171168
        %v1202 = vunpack.c.0.s8 %v1201
        %v1203 = vlaneseq
        %v1204 = vshrl.u32 %v1203, 7
        %v1205 = vsub.s32 %v1202, %v1204
        %v1206 = vrot.slane %v1197, %v1205
        %v1207 = vcombine.high %v1206, %v1206
        %v1209 = vunpack.c.l.s4 1966171168
        %v1210 = vunpack.c.0.s8 %v1209
        %v1211 = vlaneseq
        %v1212 = vshrl.u32 %v1211, 7
        %v1213 = vsub.s32 %v1210, %v1212
        %v1214 = vrot.slane %v1206, %v1213
        %v1216 = vunpack.c.l.s4 1966171168
        %v1217 = vunpack.c.0.s8 %v1216
        %v1218 = vlaneseq
        %v1219 = vshrl.u32 %v1218, 7
        %v1220 = vsub.s32 %v1217, %v1219
        %v1221 = vrot.slane %v1207, %v1220
        %v1222 = vlaneseq
        %v1223 = vshrl.u32 %v1222, 7
        %v1224 = vsub.s32 0, %v1223
        %v1225 = vrot.slane %v1214, %v1224
        %v1226 = vlaneseq
        %v1227 = vshrl.u32 %v1226, 7
        %v1228 = vsub.s32 0, %v1227
        %v1229 = vrot.slane %v1221, %v1228
        %v1232 = vmul.f32 %v1225, %v1198
        %v1233 = vmul.f32 %v1229, %v1198
        %v1234 = vadd.f32 %v1195, %v1232
        %v1235 = vadd.f32 %v1196, %v1233
        %v1236 = vld [vmem:[%s210 + $0x32] sm:$0x3]
        %v1237 = vld [vmem:[%s219 + $0xc8] sm:$0xff]
        %v1240 = vunpack.c.l.s4 1966171168
        %v1241 = vunpack.c.0.s8 %v1240
        %v1242 = vlaneseq
        %v1243 = vshrl.u32 %v1242, 7
        %v1244 = vsub.s32 %v1241, %v1243
        %v1245 = vrot.slane %v1236, %v1244
        %v1246 = vcombine.high %v1245, %v1245
        %v1248 = vunpack.c.l.s4 1966171168
        %v1249 = vunpack.c.0.s8 %v1248
        %v1250 = vlaneseq
        %v1251 = vshrl.u32 %v1250, 7
        %v1252 = vsub.s32 %v1249, %v1251
        %v1253 = vrot.slane %v1245, %v1252
        %v1255 = vunpack.c.l.s4 1966171168
        %v1256 = vunpack.c.0.s8 %v1255
        %v1257 = vlaneseq
        %v1258 = vshrl.u32 %v1257, 7
        %v1259 = vsub.s32 %v1256, %v1258
        %v1260 = vrot.slane %v1246, %v1259
        %v1261 = vlaneseq
        %v1262 = vshrl.u32 %v1261, 7
        %v1263 = vsub.s32 0, %v1262
        %v1264 = vrot.slane %v1253, %v1263
        %v1265 = vlaneseq
        %v1266 = vshrl.u32 %v1265, 7
        %v1267 = vsub.s32 0, %v1266
        %v1268 = vrot.slane %v1260, %v1267
        %v1271 = vmul.f32 %v1264, %v1237
        %v1272 = vmul.f32 %v1268, %v1237
        %v1273 = vadd.f32 %v1234, %v1271
        %v1274 = vadd.f32 %v1235, %v1272
        %v1275 = vld [vmem:[%s210 + $0x34] sm:$0x3]
        %v1276 = vld [vmem:[%s219 + $0xd0] sm:$0xff]
        %v1279 = vunpack.c.l.s4 1966171168
        %v1280 = vunpack.c.0.s8 %v1279
        %v1281 = vlaneseq
        %v1282 = vshrl.u32 %v1281, 7
        %v1283 = vsub.s32 %v1280, %v1282
        %v1284 = vrot.slane %v1275, %v1283
        %v1285 = vcombine.high %v1284, %v1284
        %v1287 = vunpack.c.l.s4 1966171168
        %v1288 = vunpack.c.0.s8 %v1287
        %v1289 = vlaneseq
        %v1290 = vshrl.u32 %v1289, 7
        %v1291 = vsub.s32 %v1288, %v1290
        %v1292 = vrot.slane %v1284, %v1291
        %v1294 = vunpack.c.l.s4 1966171168
        %v1295 = vunpack.c.0.s8 %v1294
        %v1296 = vlaneseq
        %v1297 = vshrl.u32 %v1296, 7
        %v1298 = vsub.s32 %v1295, %v1297
        %v1299 = vrot.slane %v1285, %v1298
        %v1300 = vlaneseq
        %v1301 = vshrl.u32 %v1300, 7
        %v1302 = vsub.s32 0, %v1301
        %v1303 = vrot.slane %v1292, %v1302
        %v1304 = vlaneseq
        %v1305 = vshrl.u32 %v1304, 7
        %v1306 = vsub.s32 0, %v1305
        %v1307 = vrot.slane %v1299, %v1306
        %v1310 = vmul.f32 %v1303, %v1276
        %v1311 = vmul.f32 %v1307, %v1276
        %v1312 = vadd.f32 %v1273, %v1310
        %v1313 = vadd.f32 %v1274, %v1311
        %v1314 = vld [vmem:[%s210 + $0x36] sm:$0x3]
        %v1315 = vld [vmem:[%s219 + $0xd8] sm:$0xff]
        %v1318 = vunpack.c.l.s4 1966171168
        %v1319 = vunpack.c.0.s8 %v1318
        %v1320 = vlaneseq
        %v1321 = vshrl.u32 %v1320, 7
        %v1322 = vsub.s32 %v1319, %v1321
        %v1323 = vrot.slane %v1314, %v1322
        %v1324 = vcombine.high %v1323, %v1323
        %v1326 = vunpack.c.l.s4 1966171168
        %v1327 = vunpack.c.0.s8 %v1326
        %v1328 = vlaneseq
        %v1329 = vshrl.u32 %v1328, 7
        %v1330 = vsub.s32 %v1327, %v1329
        %v1331 = vrot.slane %v1323, %v1330
        %v1333 = vunpack.c.l.s4 1966171168
        %v1334 = vunpack.c.0.s8 %v1333
        %v1335 = vlaneseq
        %v1336 = vshrl.u32 %v1335, 7
        %v1337 = vsub.s32 %v1334, %v1336
        %v1338 = vrot.slane %v1324, %v1337
        %v1339 = vlaneseq
        %v1340 = vshrl.u32 %v1339, 7
        %v1341 = vsub.s32 0, %v1340
        %v1342 = vrot.slane %v1331, %v1341
        %v1343 = vlaneseq
        %v1344 = vshrl.u32 %v1343, 7
        %v1345 = vsub.s32 0, %v1344
        %v1346 = vrot.slane %v1338, %v1345
        %v1349 = vmul.f32 %v1342, %v1315
        %v1350 = vmul.f32 %v1346, %v1315
        %v1351 = vadd.f32 %v1312, %v1349
        %v1352 = vadd.f32 %v1313, %v1350
        %v1353 = vld [vmem:[%s210 + $0x38] sm:$0x3]
        %v1354 = vld [vmem:[%s219 + $0xe0] sm:$0xff]
        %v1357 = vunpack.c.l.s4 1966171168
        %v1358 = vunpack.c.0.s8 %v1357
        %v1359 = vlaneseq
        %v1360 = vshrl.u32 %v1359, 7
        %v1361 = vsub.s32 %v1358, %v1360
        %v1362 = vrot.slane %v1353, %v1361
        %v1363 = vcombine.high %v1362, %v1362
        %v1365 = vunpack.c.l.s4 1966171168
        %v1366 = vunpack.c.0.s8 %v1365
        %v1367 = vlaneseq
        %v1368 = vshrl.u32 %v1367, 7
        %v1369 = vsub.s32 %v1366, %v1368
        %v1370 = vrot.slane %v1362, %v1369
        %v1372 = vunpack.c.l.s4 1966171168
        %v1373 = vunpack.c.0.s8 %v1372
        %v1374 = vlaneseq
        %v1375 = vshrl.u32 %v1374, 7
        %v1376 = vsub.s32 %v1373, %v1375
        %v1377 = vrot.slane %v1363, %v1376
        %v1378 = vlaneseq
        %v1379 = vshrl.u32 %v1378, 7
        %v1380 = vsub.s32 0, %v1379
        %v1381 = vrot.slane %v1370, %v1380
        %v1382 = vlaneseq
        %v1383 = vshrl.u32 %v1382, 7
        %v1384 = vsub.s32 0, %v1383
        %v1385 = vrot.slane %v1377, %v1384
        %v1388 = vmul.f32 %v1381, %v1354
        %v1389 = vmul.f32 %v1385, %v1354
        %v1390 = vadd.f32 %v1351, %v1388
        %v1391 = vadd.f32 %v1352, %v1389
        %v1392 = vld [vmem:[%s210 + $0x3a] sm:$0x3]
        %v1393 = vld [vmem:[%s219 + $0xe8] sm:$0xff]
        %v1396 = vunpack.c.l.s4 1966171168
        %v1397 = vunpack.c.0.s8 %v1396
        %v1398 = vlaneseq
        %v1399 = vshrl.u32 %v1398, 7
        %v1400 = vsub.s32 %v1397, %v1399
        %v1401 = vrot.slane %v1392, %v1400
        %v1402 = vcombine.high %v1401, %v1401
        %v1404 = vunpack.c.l.s4 1966171168
        %v1405 = vunpack.c.0.s8 %v1404
        %v1406 = vlaneseq
        %v1407 = vshrl.u32 %v1406, 7
        %v1408 = vsub.s32 %v1405, %v1407
        %v1409 = vrot.slane %v1401, %v1408
        %v1411 = vunpack.c.l.s4 1966171168
        %v1412 = vunpack.c.0.s8 %v1411
        %v1413 = vlaneseq
        %v1414 = vshrl.u32 %v1413, 7
        %v1415 = vsub.s32 %v1412, %v1414
        %v1416 = vrot.slane %v1402, %v1415
        %v1417 = vlaneseq
        %v1418 = vshrl.u32 %v1417, 7
        %v1419 = vsub.s32 0, %v1418
        %v1420 = vrot.slane %v1409, %v1419
        %v1421 = vlaneseq
        %v1422 = vshrl.u32 %v1421, 7
        %v1423 = vsub.s32 0, %v1422
        %v1424 = vrot.slane %v1416, %v1423
        %v1427 = vmul.f32 %v1420, %v1393
        %v1428 = vmul.f32 %v1424, %v1393
        %v1429 = vadd.f32 %v1390, %v1427
        %v1430 = vadd.f32 %v1391, %v1428
        %v1431 = vld [vmem:[%s210 + $0x3c] sm:$0x3]
        %v1432 = vld [vmem:[%s219 + $0xf0] sm:$0xff]
        %v1435 = vunpack.c.l.s4 1966171168
        %v1436 = vunpack.c.0.s8 %v1435
        %v1437 = vlaneseq
        %v1438 = vshrl.u32 %v1437, 7
        %v1439 = vsub.s32 %v1436, %v1438
        %v1440 = vrot.slane %v1431, %v1439
        %v1441 = vcombine.high %v1440, %v1440
        %v1443 = vunpack.c.l.s4 1966171168
        %v1444 = vunpack.c.0.s8 %v1443
        %v1445 = vlaneseq
        %v1446 = vshrl.u32 %v1445, 7
        %v1447 = vsub.s32 %v1444, %v1446
        %v1448 = vrot.slane %v1440, %v1447
        %v1450 = vunpack.c.l.s4 1966171168
        %v1451 = vunpack.c.0.s8 %v1450
        %v1452 = vlaneseq
        %v1453 = vshrl.u32 %v1452, 7
        %v1454 = vsub.s32 %v1451, %v1453
        %v1455 = vrot.slane %v1441, %v1454
        %v1456 = vlaneseq
        %v1457 = vshrl.u32 %v1456, 7
        %v1458 = vsub.s32 0, %v1457
        %v1459 = vrot.slane %v1448, %v1458
        %v1460 = vlaneseq
        %v1461 = vshrl.u32 %v1460, 7
        %v1462 = vsub.s32 0, %v1461
        %v1463 = vrot.slane %v1455, %v1462
        %v1466 = vmul.f32 %v1459, %v1432
        %v1467 = vmul.f32 %v1463, %v1432
        %v1468 = vadd.f32 %v1429, %v1466
        %v1469 = vadd.f32 %v1430, %v1467
        %v1470 = vld [vmem:[%s210 + $0x3e] sm:$0x3]
        %v1471 = vld [vmem:[%s219 + $0xf8] sm:$0xff]
        %v1474 = vunpack.c.l.s4 1966171168
        %v1475 = vunpack.c.0.s8 %v1474
        %v1476 = vlaneseq
        %v1477 = vshrl.u32 %v1476, 7
        %v1478 = vsub.s32 %v1475, %v1477
        %v1479 = vrot.slane %v1470, %v1478
        %v1480 = vcombine.high %v1479, %v1479
        %v1482 = vunpack.c.l.s4 1966171168
        %v1483 = vunpack.c.0.s8 %v1482
        %v1484 = vlaneseq
        %v1485 = vshrl.u32 %v1484, 7
        %v1486 = vsub.s32 %v1483, %v1485
        %v1487 = vrot.slane %v1479, %v1486
        %v1489 = vunpack.c.l.s4 1966171168
        %v1490 = vunpack.c.0.s8 %v1489
        %v1491 = vlaneseq
        %v1492 = vshrl.u32 %v1491, 7
        %v1493 = vsub.s32 %v1490, %v1492
        %v1494 = vrot.slane %v1480, %v1493
        %v1495 = vlaneseq
        %v1496 = vshrl.u32 %v1495, 7
        %v1497 = vsub.s32 0, %v1496
        %v1498 = vrot.slane %v1487, %v1497
        %v1499 = vlaneseq
        %v1500 = vshrl.u32 %v1499, 7
        %v1501 = vsub.s32 0, %v1500
        %v1502 = vrot.slane %v1494, %v1501
        %v1505 = vmul.f32 %v1498, %v1471
        %v1506 = vmul.f32 %v1502, %v1471
        %v1507 = vadd.f32 %v1468, %v1505
        %v1508 = vadd.f32 %v1469, %v1506
        %v1509 = vld [vmem:[%s210 + $0x40] sm:$0x3]
        %v1510 = vld [vmem:[%s219 + $0x100] sm:$0xff]
        %v1513 = vunpack.c.l.s4 1966171168
        %v1514 = vunpack.c.0.s8 %v1513
        %v1515 = vlaneseq
        %v1516 = vshrl.u32 %v1515, 7
        %v1517 = vsub.s32 %v1514, %v1516
        %v1518 = vrot.slane %v1509, %v1517
        %v1519 = vcombine.high %v1518, %v1518
        %v1521 = vunpack.c.l.s4 1966171168
        %v1522 = vunpack.c.0.s8 %v1521
        %v1523 = vlaneseq
        %v1524 = vshrl.u32 %v1523, 7
        %v1525 = vsub.s32 %v1522, %v1524
        %v1526 = vrot.slane %v1518, %v1525
        %v1528 = vunpack.c.l.s4 1966171168
        %v1529 = vunpack.c.0.s8 %v1528
        %v1530 = vlaneseq
        %v1531 = vshrl.u32 %v1530, 7
        %v1532 = vsub.s32 %v1529, %v1531
        %v1533 = vrot.slane %v1519, %v1532
        %v1534 = vlaneseq
        %v1535 = vshrl.u32 %v1534, 7
        %v1536 = vsub.s32 0, %v1535
        %v1537 = vrot.slane %v1526, %v1536
        %v1538 = vlaneseq
        %v1539 = vshrl.u32 %v1538, 7
        %v1540 = vsub.s32 0, %v1539
        %v1541 = vrot.slane %v1533, %v1540
        %v1544 = vmul.f32 %v1537, %v1510
        %v1545 = vmul.f32 %v1541, %v1510
        %v1546 = vadd.f32 %v1507, %v1544
        %v1547 = vadd.f32 %v1508, %v1545
        %v1548 = vld [vmem:[%s210 + $0x42] sm:$0x3]
        %v1549 = vld [vmem:[%s219 + $0x108] sm:$0xff]
        %v1552 = vunpack.c.l.s4 1966171168
        %v1553 = vunpack.c.0.s8 %v1552
        %v1554 = vlaneseq
        %v1555 = vshrl.u32 %v1554, 7
        %v1556 = vsub.s32 %v1553, %v1555
        %v1557 = vrot.slane %v1548, %v1556
        %v1558 = vcombine.high %v1557, %v1557
        %v1560 = vunpack.c.l.s4 1966171168
        %v1561 = vunpack.c.0.s8 %v1560
        %v1562 = vlaneseq
        %v1563 = vshrl.u32 %v1562, 7
        %v1564 = vsub.s32 %v1561, %v1563
        %v1565 = vrot.slane %v1557, %v1564
        %v1567 = vunpack.c.l.s4 1966171168
        %v1568 = vunpack.c.0.s8 %v1567
        %v1569 = vlaneseq
        %v1570 = vshrl.u32 %v1569, 7
        %v1571 = vsub.s32 %v1568, %v1570
        %v1572 = vrot.slane %v1558, %v1571
        %v1573 = vlaneseq
        %v1574 = vshrl.u32 %v1573, 7
        %v1575 = vsub.s32 0, %v1574
        %v1576 = vrot.slane %v1565, %v1575
        %v1577 = vlaneseq
        %v1578 = vshrl.u32 %v1577, 7
        %v1579 = vsub.s32 0, %v1578
        %v1580 = vrot.slane %v1572, %v1579
        %v1583 = vmul.f32 %v1576, %v1549
        %v1584 = vmul.f32 %v1580, %v1549
        %v1585 = vadd.f32 %v1546, %v1583
        %v1586 = vadd.f32 %v1547, %v1584
        %v1587 = vld [vmem:[%s210 + $0x44] sm:$0x3]
        %v1588 = vld [vmem:[%s219 + $0x110] sm:$0xff]
        %v1591 = vunpack.c.l.s4 1966171168
        %v1592 = vunpack.c.0.s8 %v1591
        %v1593 = vlaneseq
        %v1594 = vshrl.u32 %v1593, 7
        %v1595 = vsub.s32 %v1592, %v1594
        %v1596 = vrot.slane %v1587, %v1595
        %v1597 = vcombine.high %v1596, %v1596
        %v1599 = vunpack.c.l.s4 1966171168
        %v1600 = vunpack.c.0.s8 %v1599
        %v1601 = vlaneseq
        %v1602 = vshrl.u32 %v1601, 7
        %v1603 = vsub.s32 %v1600, %v1602
        %v1604 = vrot.slane %v1596, %v1603
        %v1606 = vunpack.c.l.s4 1966171168
        %v1607 = vunpack.c.0.s8 %v1606
        %v1608 = vlaneseq
        %v1609 = vshrl.u32 %v1608, 7
        %v1610 = vsub.s32 %v1607, %v1609
        %v1611 = vrot.slane %v1597, %v1610
        %v1612 = vlaneseq
        %v1613 = vshrl.u32 %v1612, 7
        %v1614 = vsub.s32 0, %v1613
        %v1615 = vrot.slane %v1604, %v1614
        %v1616 = vlaneseq
        %v1617 = vshrl.u32 %v1616, 7
        %v1618 = vsub.s32 0, %v1617
        %v1619 = vrot.slane %v1611, %v1618
        %v1622 = vmul.f32 %v1615, %v1588
        %v1623 = vmul.f32 %v1619, %v1588
        %v1624 = vadd.f32 %v1585, %v1622
        %v1625 = vadd.f32 %v1586, %v1623
        %v1626 = vld [vmem:[%s210 + $0x46] sm:$0x3]
        %v1627 = vld [vmem:[%s219 + $0x118] sm:$0xff]
        %v1630 = vunpack.c.l.s4 1966171168
        %v1631 = vunpack.c.0.s8 %v1630
        %v1632 = vlaneseq
        %v1633 = vshrl.u32 %v1632, 7
        %v1634 = vsub.s32 %v1631, %v1633
        %v1635 = vrot.slane %v1626, %v1634
        %v1636 = vcombine.high %v1635, %v1635
        %v1638 = vunpack.c.l.s4 1966171168
        %v1639 = vunpack.c.0.s8 %v1638
        %v1640 = vlaneseq
        %v1641 = vshrl.u32 %v1640, 7
        %v1642 = vsub.s32 %v1639, %v1641
        %v1643 = vrot.slane %v1635, %v1642
        %v1645 = vunpack.c.l.s4 1966171168
        %v1646 = vunpack.c.0.s8 %v1645
        %v1647 = vlaneseq
        %v1648 = vshrl.u32 %v1647, 7
        %v1649 = vsub.s32 %v1646, %v1648
        %v1650 = vrot.slane %v1636, %v1649
        %v1651 = vlaneseq
        %v1652 = vshrl.u32 %v1651, 7
        %v1653 = vsub.s32 0, %v1652
        %v1654 = vrot.slane %v1643, %v1653
        %v1655 = vlaneseq
        %v1656 = vshrl.u32 %v1655, 7
        %v1657 = vsub.s32 0, %v1656
        %v1658 = vrot.slane %v1650, %v1657
        %v1661 = vmul.f32 %v1654, %v1627
        %v1662 = vmul.f32 %v1658, %v1627
        %v1663 = vadd.f32 %v1624, %v1661
        %v1664 = vadd.f32 %v1625, %v1662
        %v1665 = vld [vmem:[%s228] sm:$0xff]
        %v1666 = vadd.f32 %v1663, %v1665
        %v1667 = vadd.f32 %v1664, %v1665
        %1668 = vst [vmem:[%s260] sm:$0xff] %v1666
        %1669 = vst [vmem:[%s260 + $0x8] sm:$0xff] %v1667
        %s1670 = sand.u32 %s109, 1
        %s1671 = scalar_lea.sflag [#allocation4], %s1670
        %s1672 = sand.u32 %s109, 1
        %s1673 = smul.addr %s1672, 16
        %s1674 = scalar_lea.vmem [#allocation8], %s1673
        // Predicated region
        $region45: #{tpu_custom_call.1} parent=31 // pred_check
          %p1675 = pneg %p119
        $region46: #{tpu_custom_call.1} parent=31 // pred_check_branch
          %1677 = sbr.rel (%p1675) target = $region48
        $region47: #{tpu_custom_call.1} parent=31 // pred_region
          %s1679 = ssub.s32 256, 256
          %1680 = vsyncadd %s1671, %s1679
          %s1681 = smul.addr %s23, 128
          %s1682 = scalar_lea.hbm %s3, %s1681
          %s1683 = sshll.u32 %s1674, 4
          %s1684 = int_to_ptr.vmem [resolvable:$true] %s1683
          %1689 = dma.vmem_to_hbm [thread:$0]  %s1684, 256, %s1682, %s1671, 128, 256, 8
        $region48: #{tpu_custom_call.1} parent=31 // pred_fallthru
          _
      $region32: #{tpu_custom_call.1} parent=5 // pred_fallthru
        _
      %p1690 = scmp.le.s32.totalorder 2, %s18
      // Predicated region
      $region49: #{tpu_custom_call.1} parent=5 // pred_check
        %p1691 = pneg %p1690
      $region50: #{tpu_custom_call.1} parent=5 // pred_check_branch
        %1693 = sbr.rel (%p1691) target = $region52
      $region51: #{tpu_custom_call.1} parent=5 // pred_region
        %s1694 = ssub.s32 %s18, 2
        // Predicated region
        $region53: #{tpu_custom_call.1} parent=51 // pred_check
          %p1695 = pneg %p125
        $region54: #{tpu_custom_call.1} parent=51 // pred_check_branch
          %1697 = sbr.rel (%p1695) target = $region56
        $region55: #{tpu_custom_call.1} parent=51 // pred_region
          %s1698 = sand.u32 %s110, 1
          %s1699 = scalar_lea.sflag [#allocation4], %s1698
          %s1700 = sand.u32 %s110, 1
          %s1701 = smul.addr %s1700, 16
          %s1702 = scalar_lea.vmem [#allocation8], %s1701
          %1703 = dma.done %s1699, 256
        $region56: #{tpu_custom_call.1} parent=51 // pred_fallthru
          _
      $region52: #{tpu_custom_call.1} parent=5 // pred_fallthru
        _
    $region6: #{tpu_custom_call.1} parent=1 // loop_footer
      %s22 = sadd.s32 1, %s18
    $region7: #{tpu_custom_call.1} parent=1 // loop_footer_branch
      %17 = sbr.rel target = $region3
    $region8: #{tpu_custom_call.1} parent=1 // loop_exit
      _
    %1704 = vsyncpa [#allocation3], 1
    %s1705 = scalar_lea.sflag [#allocation3], 1
    %1706 = vsyncpa %s1705, 1
    %1707 = vsyncpa [#allocation6], 1
    %s1708 = scalar_lea.sflag [#allocation6], 1
    %1709 = vsyncpa %s1708, 1
    %1710 = vsyncpa [#allocation4], 1
    %s1711 = scalar_lea.sflag [#allocation4], 1
    %1712 = vsyncpa %s1711, 1

</llo_original>
